<compile_context>
chip_gen: v5e
topology: v5e:2x2
jax: 0.10.0
libtpu: 0.0.40
codegen_flags: <defaults>
</compile_context>

<pallas_src>
import jax
import jax.numpy as jnp
from jax import lax
from jax.experimental import pallas as pl
from jax.experimental.pallas import tpu as pltpu


# ----------------------------------------------------------------------------- 
# Kernel
# -----------------------------------------------------------------------------
def _gr_weight_kernel(x_ref, st_ref, bias_ref, wxa_ref, wh_ref, wep_ref,
                      out_ref):
    """One batch tile: full T-step recurrence + global-state epilogue.

    x_ref    : (T, Bt, I_pad)   f32   time-major input tile
    st_ref   : (4, Bt, HP)      f32   rows: a, h0, g, c_g (lane-padded)
    bias_ref : (2, 3*HP)        f32   row 0: per-gate b, row 1: bg (2 slots)
    wxa_ref  : (I_pad+HP, 3*HP) bf16  rows 0:I_pad = wx, rows I_pad: = wa
    wh_ref   : (HP, 3*HP)       bf16  recurrent weights (z | r | c slots)
    wep_ref  : (2*HP, 2*HP)     bf16  fused [[wgh_z, wgh_t], [wgg, 0]]
    out_ref  : (2, Bt, HP)      f32   rows: g_final, c_g_new
    """
    T, Bt, i_pad = x_ref.shape
    HP = wh_ref.shape[0]
    bf16, f32 = jnp.bfloat16, jnp.float32

    # --- per-tile state (each a lane-aligned (Bt, HP) slab) ------------------
    a = st_ref[0]            # attention vector
    h0 = st_ref[1]           # initial hidden state
    g = st_ref[2]            # global gate
    cg = st_ref[3]           # global cell state
    b = bias_ref[0:1, :]               # (1, 3*HP) per-gate bias
    bg = bias_ref[1:2, 0:2 * HP]       # (1, 2*HP) global-state bias

    # --- loop-invariant weight loads (bf16, lane/sublane aligned slices) -----
    wx = wxa_ref[0:i_pad, :]                  # (I_pad, 3*HP)
    wa = wxa_ref[i_pad:i_pad + HP, :]         # (HP,    3*HP)
    whzr = wh_ref[:, 0:2 * HP]                # (HP,    2*HP)
    whc = wh_ref[:, 2 * HP:3 * HP]            # (HP,      HP)

    # --- loop-invariant projections (off the serial dependence chain) --------
    ab = jnp.dot(a.astype(bf16), wa, preferred_element_type=f32) + b   # (Bt,3HP)
    g_proj = jnp.dot(g.astype(bf16), wep_ref[HP:2 * HP, :],            # (Bt,2HP)
                     preferred_element_type=f32)

    # --- serial GRU-style recurrence over time (fully unrolled) --------------
    def cell(t, carry):
        h, _ = carry
        # Input projection for step t: independent of h, overlaps the previous
        # step's recurrent matmul (no scratch store/load round trip needed).
        gx = jnp.dot(x_ref[t].astype(bf16), wx,
                     preferred_element_type=f32) + ab                  # (Bt,3HP)
        gh = jnp.dot(h.astype(bf16), whzr, preferred_element_type=f32)
        z = jax.nn.sigmoid(gx[:, 0:HP] + gh[:, 0:HP])                  # update
        r = jax.nn.sigmoid(gx[:, HP:2 * HP] + gh[:, HP:2 * HP])        # reset
        c_tilde = jnp.tanh(
            gx[:, 2 * HP:3 * HP]
            + jnp.dot((r * h).astype(bf16), whc, preferred_element_type=f32))
        # Folded update: h + z*(c*g - h)  ==  (1-z)*h + z*(c*g), one fewer
        # dependent multiply on the serial chain.
        h_next = h + z * (c_tilde * g - h)
        return (h_next, c_tilde)

    h_fin, c_fin = lax.fori_loop(0, T, cell, (h0, jnp.zeros_like(h0)),
                                 unroll=True)

    # --- Globel_state epilogue (g-half precomputed above, no concat) ---------
    hg = (jnp.dot(h_fin.astype(bf16), wep_ref[0:HP, :],
                  preferred_element_type=f32) + g_proj + bg)           # (Bt,2HP)
    zg = jax.nn.sigmoid(hg[:, 0:HP])
    c_g_new = c_fin + zg * (cg - c_fin)
    g_final = jnp.tanh(hg[:, HP:2 * HP]) * c_g_new

    out_ref[0] = g_final
    out_ref[1] = c_g_new


# ----------------------------------------------------------------------------- 
# One-time parameter packing (hoisted out of the per-call hot path)
# -----------------------------------------------------------------------------
def pack_gr_weight_params(params, input_size, hidden_size,
                          weight_dtype=jnp.bfloat16):
    """Pack raw parameters into lane-aligned slabs. Call ONCE at init time."""
    H, I = hidden_size, input_size
    HP = ((H + 127) // 128) * 128          # lane-aligned gate slot width
    I_pad = ((I + 7) // 8) * 8             # sublane-aligned input width
    f32 = jnp.float32

    def pad_gate_cols(w, n_gates):
        # (K, n_gates*H) -> (K, n_gates*HP), each gate in its own 128-lane slot.
        out = jnp.zeros((w.shape[0], n_gates * HP), f32)
        for gi in range(n_gates):
            out = out.at[:, gi * HP:gi * HP + H].set(
                w[:, gi * H:(gi + 1) * H].astype(f32))
        return out

    def pad_rows(w, k_pad):
        return jnp.zeros((k_pad, w.shape[1]), f32).at[:w.shape[0], :].set(w)

    wx_p = pad_rows(pad_gate_cols(params["wx"], 3), I_pad)     # (I_pad, 3*HP)
    wa_p = pad_rows(pad_gate_cols(params["wa"], 3), HP)        # (HP,    3*HP)
    wxa = jnp.concatenate([wx_p, wa_p], axis=0).astype(weight_dtype)

    wh = pad_rows(pad_gate_cols(params["wh"], 3), HP).astype(weight_dtype)

    wgh_p = pad_rows(pad_gate_cols(params["wgh"], 2), HP)      # (HP, 2*HP)
    wgg_wide = jnp.concatenate(
        [params["wgg"].astype(f32), jnp.zeros((H, H), f32)], axis=1)
    wgg_p = pad_rows(pad_gate_cols(wgg_wide, 2), HP)           # (HP, 2*HP)
    wep = jnp.concatenate([wgh_p, wgg_p], axis=0).astype(weight_dtype)

    bias = jnp.zeros((2, 3 * HP), f32)
    b_flat = params["b"].reshape(3 * H).astype(f32)
    bg_flat = params["bg"].reshape(2 * H).astype(f32)
    for gi in range(3):
        bias = bias.at[0, gi * HP:gi * HP + H].set(b_flat[gi * H:(gi + 1) * H])
    for gi in range(2):
        bias = bias.at[1, gi * HP:gi * HP + H].set(bg_flat[gi * H:(gi + 1) * H])

    return {"wxa": wxa, "wh": wh, "wep": wep, "bias": bias}


# ----------------------------------------------------------------------------- 
# Batched forward wrapper
# -----------------------------------------------------------------------------
def gr_weight_forward(x, a, h0, g, c_g, packed, *, block_b=None):
    """Batched GR_Weight forward.

    x: (B, T, I); a, h0, g, c_g: (B, H).  Returns (g_final, c_g_new), (B, H).
    B == 1 reproduces the original single-sequence module semantics.
    """
    f32 = jnp.float32
    B, T, I = x.shape
    H = h0.shape[-1]
    HP = packed["wh"].shape[0]
    I_pad = packed["wxa"].shape[0] - HP

    if block_b is None:
        # 128 batch rows per tile saturates the MXU; keep smaller for tiny B.
        block_b = min(128, ((B + 7) // 8) * 8)
    assert block_b % 8 == 0
    B_pad = ((B + block_b - 1) // block_b) * block_b
    grid_n = B_pad // block_b

    # --- per-call data plumbing only (weights already packed at init) --------
    x_p = jnp.zeros((T, B_pad, I_pad), f32)
    x_p = x_p.at[:, :B, :I].set(jnp.transpose(x, (1, 0, 2)).astype(f32))

    st = jnp.zeros((4, B_pad, HP), f32)
    st = st.at[0, :B, :H].set(a.astype(f32))
    st = st.at[1, :B, :H].set(h0.astype(f32))
    st = st.at[2, :B, :H].set(g.astype(f32))
    st = st.at[3, :B, :H].set(c_g.astype(f32))

    # --- advisory cost estimate for XLA's scheduler ---------------------------
    mxu_flops = (2 * T * block_b * I_pad * 3 * HP          # x @ wx (per step)
                 + 2 * block_b * HP * 3 * HP               # a @ wa
                 + T * 2 * block_b * HP * 2 * HP           # h @ wh_zr
                 + T * 2 * block_b * HP * HP               # (r*h) @ wh_c
                 + 2 * 2 * block_b * HP * 2 * HP)          # epilogue dots
    trans = T * 3 * block_b * HP + 3 * block_b * HP
    bytes_acc = int(x_p.size * 4 + st.size * 4 + 2 * B_pad * HP * 4
                    + packed["bias"].size * 4
                    + (packed["wxa"].size + packed["wh"].size
                       + packed["wep"].size) * 2)

    out = pl.pallas_call(
        _gr_weight_kernel,
        out_shape=jax.ShapeDtypeStruct((2, B_pad, HP), f32),
        grid_spec=pltpu.PrefetchScalarGridSpec(
            num_scalar_prefetch=0,
            grid=(grid_n,),
            in_specs=[
                pl.BlockSpec((T, block_b, I_pad), lambda i: (0, i, 0)),
                pl.BlockSpec((4, block_b, HP), lambda i: (0, i, 0)),
                # weights / bias: constant block index -> stay VMEM resident
                pl.BlockSpec((2, 3 * HP), lambda i: (0, 0)),
                pl.BlockSpec((I_pad + HP, 3 * HP), lambda i: (0, 0)),
                pl.BlockSpec((HP, 3 * HP), lambda i: (0, 0)),
                pl.BlockSpec((2 * HP, 2 * HP), lambda i: (0, 0)),
            ],
            out_specs=pl.BlockSpec((2, block_b, HP), lambda i: (0, i, 0)),
        ),
        compiler_params=pltpu.CompilerParams(
            dimension_semantics=("parallel",)),     # megacore split on v7x
        cost_estimate=pl.CostEstimate(
            flops=grid_n * mxu_flops,
            transcendentals=grid_n * trans,
            bytes_accessed=bytes_acc),
    )(x_p, st, packed["bias"], packed["wxa"], packed["wh"], packed["wep"])

    return out[0, :B, :H], out[1, :B, :H]


# ----------------------------------------------------------------------------- 
# Pure-JAX reference + synthetic parameters
# -----------------------------------------------------------------------------
def _reference_single(x, a, h0, g, c_g, params):
    """Single-sequence pure-JAX reference of the same semantics."""
    H = h0.shape[0]
    h = h0.reshape(1, H)
    aa, gg = a.reshape(1, H), g.reshape(1, H)
    a_proj = aa @ params["wa"]
    c = jnp.zeros((1, H), jnp.float32)
    for t in range(x.shape[0]):
        gx = x[t:t + 1] @ params["wx"] + a_proj + params["b"]
        gh = h @ params["wh"][:, :2 * H]
        z = jax.nn.sigmoid(gx[:, :H] + gh[:, :H])
        r = jax.nn.sigmoid(gx[:, H:2 * H] + gh[:, H:2 * H])
        c = jnp.tanh(gx[:, 2 * H:] + (r * h) @ params["wh"][:, 2 * H:])
        h = (1.0 - z) * h + z * (c * gg)
    hg = h @ params["wgh"] + params["bg"]
    zg = jax.nn.sigmoid(hg[:, :H] + gg @ params["wgg"])
    c_g_new = zg * c_g.reshape(1, H) + (1.0 - zg) * c
    g_final = jnp.tanh(hg[:, H:]) * c_g_new
    return g_final.reshape(H), c_g_new.reshape(H)


def init_params(key, input_size, hidden_size):
    """Deterministic synthetic parameters (uniform(-1/sqrt(H), 1/sqrt(H)))."""
    H, I = hidden_size, input_size
    s = 1.0 / jnp.sqrt(jnp.float32(H))
    ks = jax.random.split(key, 7)
    u = lambda k, shp: jax.random.uniform(k, shp, jnp.float32, -s, s)
    return {
        "wx":  u(ks[0], (I, 3 * H)),
        "wh":  u(ks[1], (H, 3 * H)),
        "wa":  u(ks[2], (H, 3 * H)),
        "b":   u(ks[3], (1, 3 * H)),
        "wgh": u(ks[4], (H, 2 * H)),
        "wgg": u(ks[5], (H, H)),
        "bg":  u(ks[6], (1, 2 * H)),
    }


if __name__ == "__main__":
    B, T, I, H = 16, 8, 16, 32   # batch=16 sequences, seq=8, input=16, hidden=32

    key = jax.random.PRNGKey(0)
    k_p, k_x, k_a = jax.random.split(key, 3)
    params = init_params(k_p, I, H)
    packed = pack_gr_weight_params(params, I, H)   # one-time, out of hot path

    x = jax.random.normal(k_x, (B, T, I), jnp.float32)
    a = jax.random.normal(k_a, (B, H), jnp.float32)
    h0 = jnp.zeros((B, H), jnp.float32)            # self.h   = zeros(hidden)
    g = jnp.ones((B, H), jnp.float32)              # self.g   = ones(hidden)
    c_g = jnp.ones((B, H), jnp.float32)            # self.c_g = ones(hidden)

    fwd = jax.jit(gr_weight_forward, static_argnames=("block_b",))
    g_final, c_g_new = fwd(x, a, h0, g, c_g, packed, block_b=8)
    jax.block_until_ready((g_final, c_g_new))

    # Reference uses bf16-rounded weights (kernel stores weights in bf16);
    # tolerance loosened accordingly (activations/LHS are bf16-cast in-kernel).
    params_ref = {k: (v.astype(jnp.bfloat16).astype(jnp.float32)
                      if k in ("wx", "wh", "wa", "wgh", "wgg") else v)
                  for k, v in params.items()}
    ref_fn = jax.vmap(
        lambda xs, av, hv, gv, cv: _reference_single(xs, av, hv, gv, cv,
                                                     params_ref))
    g_ref, c_ref = ref_fn(x, a, h0, g, c_g)

    assert g_final.shape == (B, H) and c_g_new.shape == (B, H)
    assert jnp.allclose(g_final, g_ref, atol=3e-2, rtol=3e-2)
    assert jnp.allclose(c_g_new, c_ref, atol=3e-2, rtol=3e-2)

    print("KERNEL_OK")
</pallas_src>

<mosaic_0001>
module attributes {stable_mosaic.version = 11 : i64} {
  func.func @_gr_weight_kernel(%arg0: i32, %arg1: memref<8x8x16xf32, #tpu.memory_space<vmem>>, %arg2: memref<4x8x128xf32, #tpu.memory_space<vmem>>, %arg3: memref<2x384xf32, #tpu.memory_space<vmem>>, %arg4: memref<144x384xbf16, #tpu.memory_space<vmem>>, %arg5: memref<128x384xbf16, #tpu.memory_space<vmem>>, %arg6: memref<256x256xbf16, #tpu.memory_space<vmem>>, %arg7: memref<2x8x128xf32, #tpu.memory_space<vmem>>) attributes {dimension_semantics = [#tpu.dimension_semantics<parallel>], iteration_bounds = array<i64: 2>, scalar_prefetch = 0 : i64, scratch_operands = 0 : i64, tpu.core_type = #tpu.core_type<tc>, window_params = [{transform_indices = @transform_0, window_bounds = array<i64: 8, 8, 16>}, {transform_indices = @transform_1, window_bounds = array<i64: 4, 8, 128>}, {pipeline_mode = #tpu.pipeline_mode<synchronous>, transform_indices = @transform_2, window_bounds = array<i64: 2, 384>}, {pipeline_mode = #tpu.pipeline_mode<synchronous>, transform_indices = @transform_3, window_bounds = array<i64: 144, 384>}, {pipeline_mode = #tpu.pipeline_mode<synchronous>, transform_indices = @transform_4, window_bounds = array<i64: 128, 384>}, {pipeline_mode = #tpu.pipeline_mode<synchronous>, transform_indices = @transform_5, window_bounds = array<i64: 256, 256>}, {transform_indices = @transform_6, window_bounds = array<i64: 2, 8, 128>}]} {
    %c0 = arith.constant 0 : index
    %c0_0 = arith.constant 0 : index
    %c0_1 = arith.constant 0 : index
    %0 = vector.load %arg2[%c0, %c0_0, %c0_1] : memref<4x8x128xf32, #tpu.memory_space<vmem>>, vector<1x8x128xf32>
    %1 = vector.shape_cast %0 : vector<1x8x128xf32> to vector<8x128xf32>
    %c1 = arith.constant 1 : index
    %c0_2 = arith.constant 0 : index
    %c0_3 = arith.constant 0 : index
    %2 = vector.load %arg2[%c1, %c0_2, %c0_3] : memref<4x8x128xf32, #tpu.memory_space<vmem>>, vector<1x8x128xf32>
    %3 = vector.shape_cast %2 : vector<1x8x128xf32> to vector<8x128xf32>
    %c2 = arith.constant 2 : index
    %c0_4 = arith.constant 0 : index
    %c0_5 = arith.constant 0 : index
    %4 = vector.load %arg2[%c2, %c0_4, %c0_5] : memref<4x8x128xf32, #tpu.memory_space<vmem>>, vector<1x8x128xf32>
    %5 = vector.shape_cast %4 : vector<1x8x128xf32> to vector<8x128xf32>
    %c3 = arith.constant 3 : index
    %c0_6 = arith.constant 0 : index
    %c0_7 = arith.constant 0 : index
    %6 = vector.load %arg2[%c3, %c0_6, %c0_7] : memref<4x8x128xf32, #tpu.memory_space<vmem>>, vector<1x8x128xf32>
    %7 = vector.shape_cast %6 : vector<1x8x128xf32> to vector<8x128xf32>
    %c0_8 = arith.constant 0 : index
    %c0_9 = arith.constant 0 : index
    %8 = vector.load %arg3[%c0_8, %c0_9] : memref<2x384xf32, #tpu.memory_space<vmem>>, vector<1x384xf32>
    %c1_10 = arith.constant 1 : index
    %c0_11 = arith.constant 0 : index
    %9 = vector.load %arg3[%c1_10, %c0_11] : memref<2x384xf32, #tpu.memory_space<vmem>>, vector<1x256xf32>
    %c0_12 = arith.constant 0 : index
    %c0_13 = arith.constant 0 : index
    %10 = vector.load %arg4[%c0_12, %c0_13] : memref<144x384xbf16, #tpu.memory_space<vmem>>, vector<16x384xbf16>
    %c16 = arith.constant 16 : index
    %c0_14 = arith.constant 0 : index
    %11 = vector.load %arg4[%c16, %c0_14] : memref<144x384xbf16, #tpu.memory_space<vmem>>, vector<128x384xbf16>
    %c0_15 = arith.constant 0 : index
    %c0_16 = arith.constant 0 : index
    %12 = vector.load %arg5[%c0_15, %c0_16] : memref<128x384xbf16, #tpu.memory_space<vmem>>, vector<128x256xbf16>
    %c0_17 = arith.constant 0 : index
    %c256 = arith.constant 256 : index
    %13 = vector.load %arg5[%c0_17, %c256] : memref<128x384xbf16, #tpu.memory_space<vmem>>, vector<128x128xbf16>
    %14 = arith.truncf %1 : vector<8x128xf32> to vector<8x128xbf16>
    %cst = arith.constant dense<0.000000e+00> : vector<8x384xf32>
    %15 = tpu.matmul %14, %11, %cst {dimension_numbers = #tpu.dot_dimension_numbers<[1], [0], [0], [1], [0, 0, 1, 1], [], []>} : vector<8x128xbf16>, vector<128x384xbf16>, vector<8x384xf32> -> vector<8x384xf32>
    %16 = vector.broadcast %8 : vector<1x384xf32> to vector<8x384xf32>
    %17 = arith.addf %15, %16 : vector<8x384xf32>
    %18 = arith.truncf %5 : vector<8x128xf32> to vector<8x128xbf16>
    %c128 = arith.constant 128 : index
    %c0_18 = arith.constant 0 : index
    %19 = vector.load %arg6[%c128, %c0_18] : memref<256x256xbf16, #tpu.memory_space<vmem>>, vector<128x256xbf16>
    %cst_19 = arith.constant dense<0.000000e+00> : vector<8x256xf32>
    %20 = tpu.matmul %18, %19, %cst_19 {dimension_numbers = #tpu.dot_dimension_numbers<[1], [0], [0], [1], [0, 0, 1, 1], [], []>} : vector<8x128xbf16>, vector<128x256xbf16>, vector<8x256xf32> -> vector<8x256xf32>
    %cst_20 = arith.constant 0.000000e+00 : f32
    %21 = vector.broadcast %cst_20 : f32 to vector<8x128xf32>
    %c0_i32 = arith.constant 0 : i32
    %22 = arith.index_cast %c0_i32 : i32 to index
    %c0_21 = arith.constant 0 : index
    %c0_22 = arith.constant 0 : index
    %23 = vector.load %arg1[%22, %c0_21, %c0_22] : memref<8x8x16xf32, #tpu.memory_space<vmem>>, vector<1x8x16xf32>
    %24 = vector.shape_cast %23 : vector<1x8x16xf32> to vector<8x16xf32>
    %25 = arith.truncf %24 : vector<8x16xf32> to vector<8x16xbf16>
    %cst_23 = arith.constant dense<0.000000e+00> : vector<8x384xf32>
    %26 = tpu.matmul %25, %10, %cst_23 {dimension_numbers = #tpu.dot_dimension_numbers<[1], [0], [0], [1], [0, 0, 1, 1], [], []>} : vector<8x16xbf16>, vector<16x384xbf16>, vector<8x384xf32> -> vector<8x384xf32>
    %27 = arith.addf %26, %17 : vector<8x384xf32>
    %28 = arith.truncf %3 : vector<8x128xf32> to vector<8x128xbf16>
    %cst_24 = arith.constant dense<0.000000e+00> : vector<8x256xf32>
    %29 = tpu.matmul %28, %12, %cst_24 {dimension_numbers = #tpu.dot_dimension_numbers<[1], [0], [0], [1], [0, 0, 1, 1], [], []>} : vector<8x128xbf16>, vector<128x256xbf16>, vector<8x256xf32> -> vector<8x256xf32>
    %30 = vector.extract_strided_slice %27 {offsets = [0, 0], sizes = [8, 128], strides = [1, 1]} : vector<8x384xf32> to vector<8x128xf32>
    %31 = vector.extract_strided_slice %29 {offsets = [0, 0], sizes = [8, 128], strides = [1, 1]} : vector<8x256xf32> to vector<8x128xf32>
    %32 = arith.addf %30, %31 : vector<8x128xf32>
    %33 = arith.negf %32 : vector<8x128xf32>
    %34 = math.exp %33 : vector<8x128xf32>
    %cst_25 = arith.constant 1.000000e+00 : f32
    %35 = vector.broadcast %cst_25 : f32 to vector<8x128xf32>
    %36 = arith.addf %35, %34 : vector<8x128xf32>
    %37 = arith.divf %35, %36 : vector<8x128xf32>
    %38 = vector.extract_strided_slice %27 {offsets = [0, 128], sizes = [8, 128], strides = [1, 1]} : vector<8x384xf32> to vector<8x128xf32>
    %39 = vector.extract_strided_slice %29 {offsets = [0, 128], sizes = [8, 128], strides = [1, 1]} : vector<8x256xf32> to vector<8x128xf32>
    %40 = arith.addf %38, %39 : vector<8x128xf32>
    %41 = arith.negf %40 : vector<8x128xf32>
    %42 = math.exp %41 : vector<8x128xf32>
    %cst_26 = arith.constant 1.000000e+00 : f32
    %43 = vector.broadcast %cst_26 : f32 to vector<8x128xf32>
    %44 = arith.addf %43, %42 : vector<8x128xf32>
    %45 = arith.divf %43, %44 : vector<8x128xf32>
    %46 = vector.extract_strided_slice %27 {offsets = [0, 256], sizes = [8, 128], strides = [1, 1]} : vector<8x384xf32> to vector<8x128xf32>
    %47 = arith.mulf %45, %3 : vector<8x128xf32>
    %48 = arith.truncf %47 : vector<8x128xf32> to vector<8x128xbf16>
    %cst_27 = arith.constant dense<0.000000e+00> : vector<8x128xf32>
    %49 = tpu.matmul %48, %13, %cst_27 {dimension_numbers = #tpu.dot_dimension_numbers<[1], [0], [0], [1], [0, 0, 1, 1], [], []>} : vector<8x128xbf16>, vector<128x128xbf16>, vector<8x128xf32> -> vector<8x128xf32>
    %50 = arith.addf %46, %49 : vector<8x128xf32>
    %51 = math.tanh %50 : vector<8x128xf32>
    %52 = arith.mulf %51, %5 : vector<8x128xf32>
    %53 = arith.subf %52, %3 : vector<8x128xf32>
    %54 = arith.mulf %37, %53 : vector<8x128xf32>
    %55 = arith.addf %3, %54 : vector<8x128xf32>
    %c1_i32 = arith.constant 1 : i32
    %56 = arith.index_cast %c1_i32 : i32 to index
    %c0_28 = arith.constant 0 : index
    %c0_29 = arith.constant 0 : index
    %57 = vector.load %arg1[%56, %c0_28, %c0_29] : memref<8x8x16xf32, #tpu.memory_space<vmem>>, vector<1x8x16xf32>
    %58 = vector.shape_cast %57 : vector<1x8x16xf32> to vector<8x16xf32>
    %59 = arith.truncf %58 : vector<8x16xf32> to vector<8x16xbf16>
    %cst_30 = arith.constant dense<0.000000e+00> : vector<8x384xf32>
    %60 = tpu.matmul %59, %10, %cst_30 {dimension_numbers = #tpu.dot_dimension_numbers<[1], [0], [0], [1], [0, 0, 1, 1], [], []>} : vector<8x16xbf16>, vector<16x384xbf16>, vector<8x384xf32> -> vector<8x384xf32>
    %61 = arith.addf %60, %17 : vector<8x384xf32>
    %62 = arith.truncf %55 : vector<8x128xf32> to vector<8x128xbf16>
    %cst_31 = arith.constant dense<0.000000e+00> : vector<8x256xf32>
    %63 = tpu.matmul %62, %12, %cst_31 {dimension_numbers = #tpu.dot_dimension_numbers<[1], [0], [0], [1], [0, 0, 1, 1], [], []>} : vector<8x128xbf16>, vector<128x256xbf16>, vector<8x256xf32> -> vector<8x256xf32>
    %64 = vector.extract_strided_slice %61 {offsets = [0, 0], sizes = [8, 128], strides = [1, 1]} : vector<8x384xf32> to vector<8x128xf32>
    %65 = vector.extract_strided_slice %63 {offsets = [0, 0], sizes = [8, 128], strides = [1, 1]} : vector<8x256xf32> to vector<8x128xf32>
    %66 = arith.addf %64, %65 : vector<8x128xf32>
    %67 = arith.negf %66 : vector<8x128xf32>
    %68 = math.exp %67 : vector<8x128xf32>
    %cst_32 = arith.constant 1.000000e+00 : f32
    %69 = vector.broadcast %cst_32 : f32 to vector<8x128xf32>
    %70 = arith.addf %69, %68 : vector<8x128xf32>
    %71 = arith.divf %69, %70 : vector<8x128xf32>
    %72 = vector.extract_strided_slice %61 {offsets = [0, 128], sizes = [8, 128], strides = [1, 1]} : vector<8x384xf32> to vector<8x128xf32>
    %73 = vector.extract_strided_slice %63 {offsets = [0, 128], sizes = [8, 128], strides = [1, 1]} : vector<8x256xf32> to vector<8x128xf32>
    %74 = arith.addf %72, %73 : vector<8x128xf32>
    %75 = arith.negf %74 : vector<8x128xf32>
    %76 = math.exp %75 : vector<8x128xf32>
    %cst_33 = arith.constant 1.000000e+00 : f32
    %77 = vector.broadcast %cst_33 : f32 to vector<8x128xf32>
    %78 = arith.addf %77, %76 : vector<8x128xf32>
    %79 = arith.divf %77, %78 : vector<8x128xf32>
    %80 = vector.extract_strided_slice %61 {offsets = [0, 256], sizes = [8, 128], strides = [1, 1]} : vector<8x384xf32> to vector<8x128xf32>
    %81 = arith.mulf %79, %55 : vector<8x128xf32>
    %82 = arith.truncf %81 : vector<8x128xf32> to vector<8x128xbf16>
    %cst_34 = arith.constant dense<0.000000e+00> : vector<8x128xf32>
    %83 = tpu.matmul %82, %13, %cst_34 {dimension_numbers = #tpu.dot_dimension_numbers<[1], [0], [0], [1], [0, 0, 1, 1], [], []>} : vector<8x128xbf16>, vector<128x128xbf16>, vector<8x128xf32> -> vector<8x128xf32>
    %84 = arith.addf %80, %83 : vector<8x128xf32>
    %85 = math.tanh %84 : vector<8x128xf32>
    %86 = arith.mulf %85, %5 : vector<8x128xf32>
    %87 = arith.subf %86, %55 : vector<8x128xf32>
    %88 = arith.mulf %71, %87 : vector<8x128xf32>
    %89 = arith.addf %55, %88 : vector<8x128xf32>
    %c2_i32 = arith.constant 2 : i32
    %90 = arith.index_cast %c2_i32 : i32 to index
    %c0_35 = arith.constant 0 : index
    %c0_36 = arith.constant 0 : index
    %91 = vector.load %arg1[%90, %c0_35, %c0_36] : memref<8x8x16xf32, #tpu.memory_space<vmem>>, vector<1x8x16xf32>
    %92 = vector.shape_cast %91 : vector<1x8x16xf32> to vector<8x16xf32>
    %93 = arith.truncf %92 : vector<8x16xf32> to vector<8x16xbf16>
    %cst_37 = arith.constant dense<0.000000e+00> : vector<8x384xf32>
    %94 = tpu.matmul %93, %10, %cst_37 {dimension_numbers = #tpu.dot_dimension_numbers<[1], [0], [0], [1], [0, 0, 1, 1], [], []>} : vector<8x16xbf16>, vector<16x384xbf16>, vector<8x384xf32> -> vector<8x384xf32>
    %95 = arith.addf %94, %17 : vector<8x384xf32>
    %96 = arith.truncf %89 : vector<8x128xf32> to vector<8x128xbf16>
    %cst_38 = arith.constant dense<0.000000e+00> : vector<8x256xf32>
    %97 = tpu.matmul %96, %12, %cst_38 {dimension_numbers = #tpu.dot_dimension_numbers<[1], [0], [0], [1], [0, 0, 1, 1], [], []>} : vector<8x128xbf16>, vector<128x256xbf16>, vector<8x256xf32> -> vector<8x256xf32>
    %98 = vector.extract_strided_slice %95 {offsets = [0, 0], sizes = [8, 128], strides = [1, 1]} : vector<8x384xf32> to vector<8x128xf32>
    %99 = vector.extract_strided_slice %97 {offsets = [0, 0], sizes = [8, 128], strides = [1, 1]} : vector<8x256xf32> to vector<8x128xf32>
    %100 = arith.addf %98, %99 : vector<8x128xf32>
    %101 = arith.negf %100 : vector<8x128xf32>
    %102 = math.exp %101 : vector<8x128xf32>
    %cst_39 = arith.constant 1.000000e+00 : f32
    %103 = vector.broadcast %cst_39 : f32 to vector<8x128xf32>
    %104 = arith.addf %103, %102 : vector<8x128xf32>
    %105 = arith.divf %103, %104 : vector<8x128xf32>
    %106 = vector.extract_strided_slice %95 {offsets = [0, 128], sizes = [8, 128], strides = [1, 1]} : vector<8x384xf32> to vector<8x128xf32>
    %107 = vector.extract_strided_slice %97 {offsets = [0, 128], sizes = [8, 128], strides = [1, 1]} : vector<8x256xf32> to vector<8x128xf32>
    %108 = arith.addf %106, %107 : vector<8x128xf32>
    %109 = arith.negf %108 : vector<8x128xf32>
    %110 = math.exp %109 : vector<8x128xf32>
    %cst_40 = arith.constant 1.000000e+00 : f32
    %111 = vector.broadcast %cst_40 : f32 to vector<8x128xf32>
    %112 = arith.addf %111, %110 : vector<8x128xf32>
    %113 = arith.divf %111, %112 : vector<8x128xf32>
    %114 = vector.extract_strided_slice %95 {offsets = [0, 256], sizes = [8, 128], strides = [1, 1]} : vector<8x384xf32> to vector<8x128xf32>
    %115 = arith.mulf %113, %89 : vector<8x128xf32>
    %116 = arith.truncf %115 : vector<8x128xf32> to vector<8x128xbf16>
    %cst_41 = arith.constant dense<0.000000e+00> : vector<8x128xf32>
    %117 = tpu.matmul %116, %13, %cst_41 {dimension_numbers = #tpu.dot_dimension_numbers<[1], [0], [0], [1], [0, 0, 1, 1], [], []>} : vector<8x128xbf16>, vector<128x128xbf16>, vector<8x128xf32> -> vector<8x128xf32>
    %118 = arith.addf %114, %117 : vector<8x128xf32>
    %119 = math.tanh %118 : vector<8x128xf32>
    %120 = arith.mulf %119, %5 : vector<8x128xf32>
    %121 = arith.subf %120, %89 : vector<8x128xf32>
    %122 = arith.mulf %105, %121 : vector<8x128xf32>
    %123 = arith.addf %89, %122 : vector<8x128xf32>
    %c3_i32 = arith.constant 3 : i32
    %124 = arith.index_cast %c3_i32 : i32 to index
    %c0_42 = arith.constant 0 : index
    %c0_43 = arith.constant 0 : index
    %125 = vector.load %arg1[%124, %c0_42, %c0_43] : memref<8x8x16xf32, #tpu.memory_space<vmem>>, vector<1x8x16xf32>
    %126 = vector.shape_cast %125 : vector<1x8x16xf32> to vector<8x16xf32>
    %127 = arith.truncf %126 : vector<8x16xf32> to vector<8x16xbf16>
    %cst_44 = arith.constant dense<0.000000e+00> : vector<8x384xf32>
    %128 = tpu.matmul %127, %10, %cst_44 {dimension_numbers = #tpu.dot_dimension_numbers<[1], [0], [0], [1], [0, 0, 1, 1], [], []>} : vector<8x16xbf16>, vector<16x384xbf16>, vector<8x384xf32> -> vector<8x384xf32>
    %129 = arith.addf %128, %17 : vector<8x384xf32>
    %130 = arith.truncf %123 : vector<8x128xf32> to vector<8x128xbf16>
    %cst_45 = arith.constant dense<0.000000e+00> : vector<8x256xf32>
    %131 = tpu.matmul %130, %12, %cst_45 {dimension_numbers = #tpu.dot_dimension_numbers<[1], [0], [0], [1], [0, 0, 1, 1], [], []>} : vector<8x128xbf16>, vector<128x256xbf16>, vector<8x256xf32> -> vector<8x256xf32>
    %132 = vector.extract_strided_slice %129 {offsets = [0, 0], sizes = [8, 128], strides = [1, 1]} : vector<8x384xf32> to vector<8x128xf32>
    %133 = vector.extract_strided_slice %131 {offsets = [0, 0], sizes = [8, 128], strides = [1, 1]} : vector<8x256xf32> to vector<8x128xf32>
    %134 = arith.addf %132, %133 : vector<8x128xf32>
    %135 = arith.negf %134 : vector<8x128xf32>
    %136 = math.exp %135 : vector<8x128xf32>
    %cst_46 = arith.constant 1.000000e+00 : f32
    %137 = vector.broadcast %cst_46 : f32 to vector<8x128xf32>
    %138 = arith.addf %137, %136 : vector<8x128xf32>
    %139 = arith.divf %137, %138 : vector<8x128xf32>
    %140 = vector.extract_strided_slice %129 {offsets = [0, 128], sizes = [8, 128], strides = [1, 1]} : vector<8x384xf32> to vector<8x128xf32>
    %141 = vector.extract_strided_slice %131 {offsets = [0, 128], sizes = [8, 128], strides = [1, 1]} : vector<8x256xf32> to vector<8x128xf32>
    %142 = arith.addf %140, %141 : vector<8x128xf32>
    %143 = arith.negf %142 : vector<8x128xf32>
    %144 = math.exp %143 : vector<8x128xf32>
    %cst_47 = arith.constant 1.000000e+00 : f32
    %145 = vector.broadcast %cst_47 : f32 to vector<8x128xf32>
    %146 = arith.addf %145, %144 : vector<8x128xf32>
    %147 = arith.divf %145, %146 : vector<8x128xf32>
    %148 = vector.extract_strided_slice %129 {offsets = [0, 256], sizes = [8, 128], strides = [1, 1]} : vector<8x384xf32> to vector<8x128xf32>
    %149 = arith.mulf %147, %123 : vector<8x128xf32>
    %150 = arith.truncf %149 : vector<8x128xf32> to vector<8x128xbf16>
    %cst_48 = arith.constant dense<0.000000e+00> : vector<8x128xf32>
    %151 = tpu.matmul %150, %13, %cst_48 {dimension_numbers = #tpu.dot_dimension_numbers<[1], [0], [0], [1], [0, 0, 1, 1], [], []>} : vector<8x128xbf16>, vector<128x128xbf16>, vector<8x128xf32> -> vector<8x128xf32>
    %152 = arith.addf %148, %151 : vector<8x128xf32>
    %153 = math.tanh %152 : vector<8x128xf32>
    %154 = arith.mulf %153, %5 : vector<8x128xf32>
    %155 = arith.subf %154, %123 : vector<8x128xf32>
    %156 = arith.mulf %139, %155 : vector<8x128xf32>
    %157 = arith.addf %123, %156 : vector<8x128xf32>
    %c4_i32 = arith.constant 4 : i32
    %158 = arith.index_cast %c4_i32 : i32 to index
    %c0_49 = arith.constant 0 : index
    %c0_50 = arith.constant 0 : index
    %159 = vector.load %arg1[%158, %c0_49, %c0_50] : memref<8x8x16xf32, #tpu.memory_space<vmem>>, vector<1x8x16xf32>
    %160 = vector.shape_cast %159 : vector<1x8x16xf32> to vector<8x16xf32>
    %161 = arith.truncf %160 : vector<8x16xf32> to vector<8x16xbf16>
    %cst_51 = arith.constant dense<0.000000e+00> : vector<8x384xf32>
    %162 = tpu.matmul %161, %10, %cst_51 {dimension_numbers = #tpu.dot_dimension_numbers<[1], [0], [0], [1], [0, 0, 1, 1], [], []>} : vector<8x16xbf16>, vector<16x384xbf16>, vector<8x384xf32> -> vector<8x384xf32>
    %163 = arith.addf %162, %17 : vector<8x384xf32>
    %164 = arith.truncf %157 : vector<8x128xf32> to vector<8x128xbf16>
    %cst_52 = arith.constant dense<0.000000e+00> : vector<8x256xf32>
    %165 = tpu.matmul %164, %12, %cst_52 {dimension_numbers = #tpu.dot_dimension_numbers<[1], [0], [0], [1], [0, 0, 1, 1], [], []>} : vector<8x128xbf16>, vector<128x256xbf16>, vector<8x256xf32> -> vector<8x256xf32>
    %166 = vector.extract_strided_slice %163 {offsets = [0, 0], sizes = [8, 128], strides = [1, 1]} : vector<8x384xf32> to vector<8x128xf32>
    %167 = vector.extract_strided_slice %165 {offsets = [0, 0], sizes = [8, 128], strides = [1, 1]} : vector<8x256xf32> to vector<8x128xf32>
    %168 = arith.addf %166, %167 : vector<8x128xf32>
    %169 = arith.negf %168 : vector<8x128xf32>
    %170 = math.exp %169 : vector<8x128xf32>
    %cst_53 = arith.constant 1.000000e+00 : f32
    %171 = vector.broadcast %cst_53 : f32 to vector<8x128xf32>
    %172 = arith.addf %171, %170 : vector<8x128xf32>
    %173 = arith.divf %171, %172 : vector<8x128xf32>
    %174 = vector.extract_strided_slice %163 {offsets = [0, 128], sizes = [8, 128], strides = [1, 1]} : vector<8x384xf32> to vector<8x128xf32>
    %175 = vector.extract_strided_slice %165 {offsets = [0, 128], sizes = [8, 128], strides = [1, 1]} : vector<8x256xf32> to vector<8x128xf32>
    %176 = arith.addf %174, %175 : vector<8x128xf32>
    %177 = arith.negf %176 : vector<8x128xf32>
    %178 = math.exp %177 : vector<8x128xf32>
    %cst_54 = arith.constant 1.000000e+00 : f32
    %179 = vector.broadcast %cst_54 : f32 to vector<8x128xf32>
    %180 = arith.addf %179, %178 : vector<8x128xf32>
    %181 = arith.divf %179, %180 : vector<8x128xf32>
    %182 = vector.extract_strided_slice %163 {offsets = [0, 256], sizes = [8, 128], strides = [1, 1]} : vector<8x384xf32> to vector<8x128xf32>
    %183 = arith.mulf %181, %157 : vector<8x128xf32>
    %184 = arith.truncf %183 : vector<8x128xf32> to vector<8x128xbf16>
    %cst_55 = arith.constant dense<0.000000e+00> : vector<8x128xf32>
    %185 = tpu.matmul %184, %13, %cst_55 {dimension_numbers = #tpu.dot_dimension_numbers<[1], [0], [0], [1], [0, 0, 1, 1], [], []>} : vector<8x128xbf16>, vector<128x128xbf16>, vector<8x128xf32> -> vector<8x128xf32>
    %186 = arith.addf %182, %185 : vector<8x128xf32>
    %187 = math.tanh %186 : vector<8x128xf32>
    %188 = arith.mulf %187, %5 : vector<8x128xf32>
    %189 = arith.subf %188, %157 : vector<8x128xf32>
    %190 = arith.mulf %173, %189 : vector<8x128xf32>
    %191 = arith.addf %157, %190 : vector<8x128xf32>
    %c5_i32 = arith.constant 5 : i32
    %192 = arith.index_cast %c5_i32 : i32 to index
    %c0_56 = arith.constant 0 : index
    %c0_57 = arith.constant 0 : index
    %193 = vector.load %arg1[%192, %c0_56, %c0_57] : memref<8x8x16xf32, #tpu.memory_space<vmem>>, vector<1x8x16xf32>
    %194 = vector.shape_cast %193 : vector<1x8x16xf32> to vector<8x16xf32>
    %195 = arith.truncf %194 : vector<8x16xf32> to vector<8x16xbf16>
    %cst_58 = arith.constant dense<0.000000e+00> : vector<8x384xf32>
    %196 = tpu.matmul %195, %10, %cst_58 {dimension_numbers = #tpu.dot_dimension_numbers<[1], [0], [0], [1], [0, 0, 1, 1], [], []>} : vector<8x16xbf16>, vector<16x384xbf16>, vector<8x384xf32> -> vector<8x384xf32>
    %197 = arith.addf %196, %17 : vector<8x384xf32>
    %198 = arith.truncf %191 : vector<8x128xf32> to vector<8x128xbf16>
    %cst_59 = arith.constant dense<0.000000e+00> : vector<8x256xf32>
    %199 = tpu.matmul %198, %12, %cst_59 {dimension_numbers = #tpu.dot_dimension_numbers<[1], [0], [0], [1], [0, 0, 1, 1], [], []>} : vector<8x128xbf16>, vector<128x256xbf16>, vector<8x256xf32> -> vector<8x256xf32>
    %200 = vector.extract_strided_slice %197 {offsets = [0, 0], sizes = [8, 128], strides = [1, 1]} : vector<8x384xf32> to vector<8x128xf32>
    %201 = vector.extract_strided_slice %199 {offsets = [0, 0], sizes = [8, 128], strides = [1, 1]} : vector<8x256xf32> to vector<8x128xf32>
    %202 = arith.addf %200, %201 : vector<8x128xf32>
    %203 = arith.negf %202 : vector<8x128xf32>
    %204 = math.exp %203 : vector<8x128xf32>
    %cst_60 = arith.constant 1.000000e+00 : f32
    %205 = vector.broadcast %cst_60 : f32 to vector<8x128xf32>
    %206 = arith.addf %205, %204 : vector<8x128xf32>
    %207 = arith.divf %205, %206 : vector<8x128xf32>
    %208 = vector.extract_strided_slice %197 {offsets = [0, 128], sizes = [8, 128], strides = [1, 1]} : vector<8x384xf32> to vector<8x128xf32>
    %209 = vector.extract_strided_slice %199 {offsets = [0, 128], sizes = [8, 128], strides = [1, 1]} : vector<8x256xf32> to vector<8x128xf32>
    %210 = arith.addf %208, %209 : vector<8x128xf32>
    %211 = arith.negf %210 : vector<8x128xf32>
    %212 = math.exp %211 : vector<8x128xf32>
    %cst_61 = arith.constant 1.000000e+00 : f32
    %213 = vector.broadcast %cst_61 : f32 to vector<8x128xf32>
    %214 = arith.addf %213, %212 : vector<8x128xf32>
    %215 = arith.divf %213, %214 : vector<8x128xf32>
    %216 = vector.extract_strided_slice %197 {offsets = [0, 256], sizes = [8, 128], strides = [1, 1]} : vector<8x384xf32> to vector<8x128xf32>
    %217 = arith.mulf %215, %191 : vector<8x128xf32>
    %218 = arith.truncf %217 : vector<8x128xf32> to vector<8x128xbf16>
    %cst_62 = arith.constant dense<0.000000e+00> : vector<8x128xf32>
    %219 = tpu.matmul %218, %13, %cst_62 {dimension_numbers = #tpu.dot_dimension_numbers<[1], [0], [0], [1], [0, 0, 1, 1], [], []>} : vector<8x128xbf16>, vector<128x128xbf16>, vector<8x128xf32> -> vector<8x128xf32>
    %220 = arith.addf %216, %219 : vector<8x128xf32>
    %221 = math.tanh %220 : vector<8x128xf32>
    %222 = arith.mulf %221, %5 : vector<8x128xf32>
    %223 = arith.subf %222, %191 : vector<8x128xf32>
    %224 = arith.mulf %207, %223 : vector<8x128xf32>
    %225 = arith.addf %191, %224 : vector<8x128xf32>
    %c6_i32 = arith.constant 6 : i32
    %226 = arith.index_cast %c6_i32 : i32 to index
    %c0_63 = arith.constant 0 : index
    %c0_64 = arith.constant 0 : index
    %227 = vector.load %arg1[%226, %c0_63, %c0_64] : memref<8x8x16xf32, #tpu.memory_space<vmem>>, vector<1x8x16xf32>
    %228 = vector.shape_cast %227 : vector<1x8x16xf32> to vector<8x16xf32>
    %229 = arith.truncf %228 : vector<8x16xf32> to vector<8x16xbf16>
    %cst_65 = arith.constant dense<0.000000e+00> : vector<8x384xf32>
    %230 = tpu.matmul %229, %10, %cst_65 {dimension_numbers = #tpu.dot_dimension_numbers<[1], [0], [0], [1], [0, 0, 1, 1], [], []>} : vector<8x16xbf16>, vector<16x384xbf16>, vector<8x384xf32> -> vector<8x384xf32>
    %231 = arith.addf %230, %17 : vector<8x384xf32>
    %232 = arith.truncf %225 : vector<8x128xf32> to vector<8x128xbf16>
    %cst_66 = arith.constant dense<0.000000e+00> : vector<8x256xf32>
    %233 = tpu.matmul %232, %12, %cst_66 {dimension_numbers = #tpu.dot_dimension_numbers<[1], [0], [0], [1], [0, 0, 1, 1], [], []>} : vector<8x128xbf16>, vector<128x256xbf16>, vector<8x256xf32> -> vector<8x256xf32>
    %234 = vector.extract_strided_slice %231 {offsets = [0, 0], sizes = [8, 128], strides = [1, 1]} : vector<8x384xf32> to vector<8x128xf32>
    %235 = vector.extract_strided_slice %233 {offsets = [0, 0], sizes = [8, 128], strides = [1, 1]} : vector<8x256xf32> to vector<8x128xf32>
    %236 = arith.addf %234, %235 : vector<8x128xf32>
    %237 = arith.negf %236 : vector<8x128xf32>
    %238 = math.exp %237 : vector<8x128xf32>
    %cst_67 = arith.constant 1.000000e+00 : f32
    %239 = vector.broadcast %cst_67 : f32 to vector<8x128xf32>
    %240 = arith.addf %239, %238 : vector<8x128xf32>
    %241 = arith.divf %239, %240 : vector<8x128xf32>
    %242 = vector.extract_strided_slice %231 {offsets = [0, 128], sizes = [8, 128], strides = [1, 1]} : vector<8x384xf32> to vector<8x128xf32>
    %243 = vector.extract_strided_slice %233 {offsets = [0, 128], sizes = [8, 128], strides = [1, 1]} : vector<8x256xf32> to vector<8x128xf32>
    %244 = arith.addf %242, %243 : vector<8x128xf32>
    %245 = arith.negf %244 : vector<8x128xf32>
    %246 = math.exp %245 : vector<8x128xf32>
    %cst_68 = arith.constant 1.000000e+00 : f32
    %247 = vector.broadcast %cst_68 : f32 to vector<8x128xf32>
    %248 = arith.addf %247, %246 : vector<8x128xf32>
    %249 = arith.divf %247, %248 : vector<8x128xf32>
    %250 = vector.extract_strided_slice %231 {offsets = [0, 256], sizes = [8, 128], strides = [1, 1]} : vector<8x384xf32> to vector<8x128xf32>
    %251 = arith.mulf %249, %225 : vector<8x128xf32>
    %252 = arith.truncf %251 : vector<8x128xf32> to vector<8x128xbf16>
    %cst_69 = arith.constant dense<0.000000e+00> : vector<8x128xf32>
    %253 = tpu.matmul %252, %13, %cst_69 {dimension_numbers = #tpu.dot_dimension_numbers<[1], [0], [0], [1], [0, 0, 1, 1], [], []>} : vector<8x128xbf16>, vector<128x128xbf16>, vector<8x128xf32> -> vector<8x128xf32>
    %254 = arith.addf %250, %253 : vector<8x128xf32>
    %255 = math.tanh %254 : vector<8x128xf32>
    %256 = arith.mulf %255, %5 : vector<8x128xf32>
    %257 = arith.subf %256, %225 : vector<8x128xf32>
    %258 = arith.mulf %241, %257 : vector<8x128xf32>
    %259 = arith.addf %225, %258 : vector<8x128xf32>
    %c7_i32 = arith.constant 7 : i32
    %260 = arith.index_cast %c7_i32 : i32 to index
    %c0_70 = arith.constant 0 : index
    %c0_71 = arith.constant 0 : index
    %261 = vector.load %arg1[%260, %c0_70, %c0_71] : memref<8x8x16xf32, #tpu.memory_space<vmem>>, vector<1x8x16xf32>
    %262 = vector.shape_cast %261 : vector<1x8x16xf32> to vector<8x16xf32>
    %263 = arith.truncf %262 : vector<8x16xf32> to vector<8x16xbf16>
    %cst_72 = arith.constant dense<0.000000e+00> : vector<8x384xf32>
    %264 = tpu.matmul %263, %10, %cst_72 {dimension_numbers = #tpu.dot_dimension_numbers<[1], [0], [0], [1], [0, 0, 1, 1], [], []>} : vector<8x16xbf16>, vector<16x384xbf16>, vector<8x384xf32> -> vector<8x384xf32>
    %265 = arith.addf %264, %17 : vector<8x384xf32>
    %266 = arith.truncf %259 : vector<8x128xf32> to vector<8x128xbf16>
    %cst_73 = arith.constant dense<0.000000e+00> : vector<8x256xf32>
    %267 = tpu.matmul %266, %12, %cst_73 {dimension_numbers = #tpu.dot_dimension_numbers<[1], [0], [0], [1], [0, 0, 1, 1], [], []>} : vector<8x128xbf16>, vector<128x256xbf16>, vector<8x256xf32> -> vector<8x256xf32>
    %268 = vector.extract_strided_slice %265 {offsets = [0, 0], sizes = [8, 128], strides = [1, 1]} : vector<8x384xf32> to vector<8x128xf32>
    %269 = vector.extract_strided_slice %267 {offsets = [0, 0], sizes = [8, 128], strides = [1, 1]} : vector<8x256xf32> to vector<8x128xf32>
    %270 = arith.addf %268, %269 : vector<8x128xf32>
    %271 = arith.negf %270 : vector<8x128xf32>
    %272 = math.exp %271 : vector<8x128xf32>
    %cst_74 = arith.constant 1.000000e+00 : f32
    %273 = vector.broadcast %cst_74 : f32 to vector<8x128xf32>
    %274 = arith.addf %273, %272 : vector<8x128xf32>
    %275 = arith.divf %273, %274 : vector<8x128xf32>
    %276 = vector.extract_strided_slice %265 {offsets = [0, 128], sizes = [8, 128], strides = [1, 1]} : vector<8x384xf32> to vector<8x128xf32>
    %277 = vector.extract_strided_slice %267 {offsets = [0, 128], sizes = [8, 128], strides = [1, 1]} : vector<8x256xf32> to vector<8x128xf32>
    %278 = arith.addf %276, %277 : vector<8x128xf32>
    %279 = arith.negf %278 : vector<8x128xf32>
    %280 = math.exp %279 : vector<8x128xf32>
    %cst_75 = arith.constant 1.000000e+00 : f32
    %281 = vector.broadcast %cst_75 : f32 to vector<8x128xf32>
    %282 = arith.addf %281, %280 : vector<8x128xf32>
    %283 = arith.divf %281, %282 : vector<8x128xf32>
    %284 = vector.extract_strided_slice %265 {offsets = [0, 256], sizes = [8, 128], strides = [1, 1]} : vector<8x384xf32> to vector<8x128xf32>
    %285 = arith.mulf %283, %259 : vector<8x128xf32>
    %286 = arith.truncf %285 : vector<8x128xf32> to vector<8x128xbf16>
    %cst_76 = arith.constant dense<0.000000e+00> : vector<8x128xf32>
    %287 = tpu.matmul %286, %13, %cst_76 {dimension_numbers = #tpu.dot_dimension_numbers<[1], [0], [0], [1], [0, 0, 1, 1], [], []>} : vector<8x128xbf16>, vector<128x128xbf16>, vector<8x128xf32> -> vector<8x128xf32>
    %288 = arith.addf %284, %287 : vector<8x128xf32>
    %289 = math.tanh %288 : vector<8x128xf32>
    %290 = arith.mulf %289, %5 : vector<8x128xf32>
    %291 = arith.subf %290, %259 : vector<8x128xf32>
    %292 = arith.mulf %275, %291 : vector<8x128xf32>
    %293 = arith.addf %259, %292 : vector<8x128xf32>
    %c8_i32 = arith.constant 8 : i32
    %294 = arith.truncf %293 : vector<8x128xf32> to vector<8x128xbf16>
    %c0_77 = arith.constant 0 : index
    %c0_78 = arith.constant 0 : index
    %295 = vector.load %arg6[%c0_77, %c0_78] : memref<256x256xbf16, #tpu.memory_space<vmem>>, vector<128x256xbf16>
    %cst_79 = arith.constant dense<0.000000e+00> : vector<8x256xf32>
    %296 = tpu.matmul %294, %295, %cst_79 {dimension_numbers = #tpu.dot_dimension_numbers<[1], [0], [0], [1], [0, 0, 1, 1], [], []>} : vector<8x128xbf16>, vector<128x256xbf16>, vector<8x256xf32> -> vector<8x256xf32>
    %297 = arith.addf %296, %20 : vector<8x256xf32>
    %298 = vector.broadcast %9 : vector<1x256xf32> to vector<8x256xf32>
    %299 = arith.addf %297, %298 : vector<8x256xf32>
    %300 = vector.extract_strided_slice %299 {offsets = [0, 0], sizes = [8, 128], strides = [1, 1]} : vector<8x256xf32> to vector<8x128xf32>
    %301 = arith.negf %300 : vector<8x128xf32>
    %302 = math.exp %301 : vector<8x128xf32>
    %cst_80 = arith.constant 1.000000e+00 : f32
    %303 = vector.broadcast %cst_80 : f32 to vector<8x128xf32>
    %304 = arith.addf %303, %302 : vector<8x128xf32>
    %305 = arith.divf %303, %304 : vector<8x128xf32>
    %306 = arith.subf %7, %289 : vector<8x128xf32>
    %307 = arith.mulf %305, %306 : vector<8x128xf32>
    %308 = arith.addf %289, %307 : vector<8x128xf32>
    %309 = vector.extract_strided_slice %299 {offsets = [0, 128], sizes = [8, 128], strides = [1, 1]} : vector<8x256xf32> to vector<8x128xf32>
    %310 = math.tanh %309 : vector<8x128xf32>
    %311 = arith.mulf %310, %308 : vector<8x128xf32>
    %c0_81 = arith.constant 0 : index
    %c0_82 = arith.constant 0 : index
    %c0_83 = arith.constant 0 : index
    %312 = vector.load %arg7[%c0_81, %c0_82, %c0_83] : memref<2x8x128xf32, #tpu.memory_space<vmem>>, vector<1x8x128xf32>
    %313 = vector.shape_cast %312 : vector<1x8x128xf32> to vector<8x128xf32>
    %314 = vector.shape_cast %311 : vector<8x128xf32> to vector<1x8x128xf32>
    tpu.vector_store %arg7[%c0_81, %c0_82, %c0_83], %314 {strides = array<i32>} : memref<2x8x128xf32, #tpu.memory_space<vmem>>, vector<1x8x128xf32>,
    %c1_84 = arith.constant 1 : index
    %c0_85 = arith.constant 0 : index
    %c0_86 = arith.constant 0 : index
    %315 = vector.load %arg7[%c1_84, %c0_85, %c0_86] : memref<2x8x128xf32, #tpu.memory_space<vmem>>, vector<1x8x128xf32>
    %316 = vector.shape_cast %315 : vector<1x8x128xf32> to vector<8x128xf32>
    %317 = vector.shape_cast %308 : vector<8x128xf32> to vector<1x8x128xf32>
    tpu.vector_store %arg7[%c1_84, %c0_85, %c0_86], %317 {strides = array<i32>} : memref<2x8x128xf32, #tpu.memory_space<vmem>>, vector<1x8x128xf32>,
    return
  }
  func.func @transform_0(%arg0: i32) -> (i32, i32, i32) {
    %c0_i32 = arith.constant 0 : i32
    %c0_i32_0 = arith.constant 0 : i32
    %c0_i32_1 = arith.constant 0 : i32
    return %c0_i32, %arg0, %c0_i32_0 : i32, i32, i32
  }
  func.func @transform_1(%arg0: i32) -> (i32, i32, i32) {
    %c0_i32 = arith.constant 0 : i32
    %c0_i32_0 = arith.constant 0 : i32
    %c0_i32_1 = arith.constant 0 : i32
    return %c0_i32, %arg0, %c0_i32_0 : i32, i32, i32
  }
  func.func @transform_2(%arg0: i32) -> (i32, i32) {
    %c0_i32 = arith.constant 0 : i32
    %c0_i32_0 = arith.constant 0 : i32
    %c0_i32_1 = arith.constant 0 : i32
    return %c0_i32, %c0_i32_0 : i32, i32
  }
  func.func @transform_3(%arg0: i32) -> (i32, i32) {
    %c0_i32 = arith.constant 0 : i32
    %c0_i32_0 = arith.constant 0 : i32
    %c0_i32_1 = arith.constant 0 : i32
    return %c0_i32, %c0_i32_0 : i32, i32
  }
  func.func @transform_4(%arg0: i32) -> (i32, i32) {
    %c0_i32 = arith.constant 0 : i32
    %c0_i32_0 = arith.constant 0 : i32
    %c0_i32_1 = arith.constant 0 : i32
    return %c0_i32, %c0_i32_0 : i32, i32
  }
  func.func @transform_5(%arg0: i32) -> (i32, i32) {
    %c0_i32 = arith.constant 0 : i32
    %c0_i32_0 = arith.constant 0 : i32
    %c0_i32_1 = arith.constant 0 : i32
    return %c0_i32, %c0_i32_0 : i32, i32
  }
  func.func @transform_6(%arg0: i32) -> (i32, i32, i32) {
    %c0_i32 = arith.constant 0 : i32
    %c0_i32_0 = arith.constant 0 : i32
    %c0_i32_1 = arith.constant 0 : i32
    return %c0_i32, %arg0, %c0_i32_0 : i32, i32, i32
  }
}

</mosaic_0001>

<llo_original>
// kernel: gr_weight_forward.1
$region0: #{gr_weight_forward.1}
  #allocation0 [shape = 'u32[]', space=smem, size = 0x4, offset = 0x4, fixed_abs, tag = 'smem constant byte address 0x4 - core index']
  #allocation1 [shape = 'u32[72,128]{1,0:T(1,128)}', space=vmem, size = 0x9000, scoped, tag = 'internal scratch']
  %s0 = inlined_call_operand.vmem [shape: f32[8,16,16], index: 0, kind: input, shape index: {}]
  %s1 = inlined_call_operand.vmem [shape: f32[4,16,128], index: 1, kind: input, shape index: {}]
  %s2 = inlined_call_operand.vmem [shape: f32[2,384], index: 2, kind: input, shape index: {}]
  %s3 = inlined_call_operand.hbm [shape: bf16[144,384], index: 3, kind: input, shape index: {}]
  %s4 = inlined_call_operand.hbm [shape: bf16[128,384], index: 4, kind: input, shape index: {}]
  %s5 = inlined_call_operand.vmem [shape: bf16[256,256], index: 5, kind: input, shape index: {}]
  %s6 = inlined_call_operand.vmem [shape: f32[2,16,128], index: 6, kind: output, shape index: {}]
  %s7 = sld [smem:[#allocation0]]
  $region175: #{gr_weight_forward.1} parent=0
    _
  %s9 = ssub.s32 1, %s7
  %s10 = scalar_select 0, %s9, %s7
  $region1: #{gr_weight_forward.1} parent=0
    #allocation2 [shape = 'u8[65536]{0}', space=vmem, size = 0x10000, scoped, tag = 'input window, operand 0']
    #allocation3 [shape = 'u8[32768]{0}', space=vmem, size = 0x8000, scoped, tag = 'input window, operand 1']
    #allocation4 [shape = 'u8[110592]{0}', space=vmem, size = 0x1b000, scoped, tag = 'input window, operand 3, single buffered']
    #allocation5 [shape = 's32[2]{0}', space=sflag, size = 0x8, scoped, tag = 'scoped memory for gr_weight_forward.1']
    #allocation6 [shape = 'u8[98304]{0}', space=vmem, size = 0x18000, scoped, tag = 'input window, operand 4, single buffered']
    #allocation7 [shape = 's32[1]{0}', space=sflag, size = 0x4, scoped, tag = 'scoped memory for gr_weight_forward.1']
    #allocation8 [shape = 'u8[16384]{0}', space=vmem, size = 0x4000, scoped, tag = 'output window, operand 0']
    %11 = vsyncpa [#allocation5], 0
    %12 = vsyncpa [#allocation7], 0
    loop: start=0, step=1, limit=4
    $region2: #{gr_weight_forward.1} parent=1 // loop_pre_header
      _
    $region3: #{gr_weight_forward.1} parent=1 // loop_header
      %s14 = sphi 0, %s18
      %p15 = scmp.ge.s32.totalorder %s14, 4
      %s24 = sphi 0, %s26
      %s27 = sphi 0, %s24
      %s28 = sphi 0, %s27
      %s44 = sphi 0, %s28
      %s50 = sphi 0, %s52
      %s53 = sphi 0, %s50
      %s54 = sphi 0, %s53
      %s70 = sphi 0, %s54
      %s74 = sphi 0, %s74
      %s76 = sphi 0, %s74
      %s77 = sphi 0, %s76
      %s91 = sphi 0, %s77
      %s95 = sphi 0, %s95
      %s97 = sphi 0, %s95
      %s98 = sphi 0, %s97
      %s112 = sphi 0, %s98
      %s116 = sphi 0, %s116
      %s118 = sphi 0, %s116
      %s119 = sphi 0, %s118
      %s133 = sphi 0, %s119
      %s137 = sphi 0, %s137
      %s139 = sphi 0, %s137
      %s140 = sphi 0, %s139
      %s154 = sphi 0, %s140
      %s160 = sphi 0, %s162
      %s163 = sphi 0, %s160
      %s164 = sphi 0, %s163
      %s180 = sphi 0, %s164
    $region4: #{gr_weight_forward.1} parent=1 // loop_header_branch
      %17 = sbr.rel (%p15) target = $region8
    $region5: #{gr_weight_forward.1} parent=1 // loop_body
      %s19 = ssub.s32 %s14, 1
      %s20 = ssub.s32 %s14, 2
      %s21 = sadd.s32 %s14, 1
      %s22 = ssub.s32 %s14, %s21
      %p23 = scmp.eq.s32.totalorder %s22, 0
      %s25 = sadd.s32 %s24, 1
      %s26 = scalar_select %p23, %s24, %s25
      %p29 = pneg %p23
      %p30 = scmp.eq.s32.totalorder %s14, 1
      %p31 = por %p29, %p30
      %p32 = scmp.ne.s32.totalorder %s24, %s27
      %p33 = scmp.eq.s32.totalorder %s14, 0
      %p34 = por %p32, %p33
      %p35 = scmp.ne.s32.totalorder %s24, %s27
      %p36 = scmp.eq.s32.totalorder %s19, 1
      %p37 = por %p35, %p36
      %p38 = scmp.ne.s32.totalorder %s27, %s28
      %p39 = scmp.eq.s32.totalorder %s19, 0
      %p40 = por %p38, %p39
      %p41 = scmp.ne.s32.totalorder %s27, %s28
      %p42 = scmp.eq.s32.totalorder %s20, 1
      %p43 = por %p41, %p42
      %p45 = scmp.ne.s32.totalorder %s28, %s44
      %p46 = scmp.eq.s32.totalorder %s20, 0
      %p47 = por %p45, %p46
      %s48 = ssub.s32 %s14, %s21
      %p49 = scmp.eq.s32.totalorder %s48, 0
      %s51 = sadd.s32 %s50, 1
      %s52 = scalar_select %p49, %s50, %s51
      %p55 = pneg %p49
      %p56 = scmp.eq.s32.totalorder %s14, 1
      %p57 = por %p55, %p56
      %p58 = scmp.ne.s32.totalorder %s50, %s53
      %p59 = scmp.eq.s32.totalorder %s14, 0
      %p60 = por %p58, %p59
      %p61 = scmp.ne.s32.totalorder %s50, %s53
      %p62 = scmp.eq.s32.totalorder %s19, 1
      %p63 = por %p61, %p62
      %p64 = scmp.ne.s32.totalorder %s53, %s54
      %p65 = scmp.eq.s32.totalorder %s19, 0
      %p66 = por %p64, %p65
      %p67 = scmp.ne.s32.totalorder %s53, %s54
      %p68 = scmp.eq.s32.totalorder %s20, 1
      %p69 = por %p67, %p68
      %p71 = scmp.ne.s32.totalorder %s54, %s70
      %p72 = scmp.eq.s32.totalorder %s20, 0
      %p73 = por %p71, %p72
      %s75 = sadd.s32 %s74, 1
      %p78 = scmp.eq.s32.totalorder %s14, 1
      %p79 = scmp.ne.s32.totalorder %s74, %s76
      %p80 = scmp.eq.s32.totalorder %s14, 0
      %p81 = por %p79, %p80
      %p82 = scmp.ne.s32.totalorder %s74, %s76
      %p83 = scmp.eq.s32.totalorder %s19, 1
      %p84 = por %p82, %p83
      %p85 = scmp.ne.s32.totalorder %s76, %s77
      %p86 = scmp.eq.s32.totalorder %s19, 0
      %p87 = por %p85, %p86
      %p88 = scmp.ne.s32.totalorder %s76, %s77
      %p89 = scmp.eq.s32.totalorder %s20, 1
      %p90 = por %p88, %p89
      %p92 = scmp.ne.s32.totalorder %s77, %s91
      %p93 = scmp.eq.s32.totalorder %s20, 0
      %p94 = por %p92, %p93
      %s96 = sadd.s32 %s95, 1
      %p99 = scmp.eq.s32.totalorder %s14, 1
      %p100 = scmp.ne.s32.totalorder %s95, %s97
      %p101 = scmp.eq.s32.totalorder %s14, 0
      %p102 = por %p100, %p101
      %p103 = scmp.ne.s32.totalorder %s95, %s97
      %p104 = scmp.eq.s32.totalorder %s19, 1
      %p105 = por %p103, %p104
      %p106 = scmp.ne.s32.totalorder %s97, %s98
      %p107 = scmp.eq.s32.totalorder %s19, 0
      %p108 = por %p106, %p107
      %p109 = scmp.ne.s32.totalorder %s97, %s98
      %p110 = scmp.eq.s32.totalorder %s20, 1
      %p111 = por %p109, %p110
      %p113 = scmp.ne.s32.totalorder %s98, %s112
      %p114 = scmp.eq.s32.totalorder %s20, 0
      %p115 = por %p113, %p114
      %s117 = sadd.s32 %s116, 1
      %p120 = scmp.eq.s32.totalorder %s14, 1
      %p121 = scmp.ne.s32.totalorder %s116, %s118
      %p122 = scmp.eq.s32.totalorder %s14, 0
      %p123 = por %p121, %p122
      %p124 = scmp.ne.s32.totalorder %s116, %s118
      %p125 = scmp.eq.s32.totalorder %s19, 1
      %p126 = por %p124, %p125
      %p127 = scmp.ne.s32.totalorder %s118, %s119
      %p128 = scmp.eq.s32.totalorder %s19, 0
      %p129 = por %p127, %p128
      %p130 = scmp.ne.s32.totalorder %s118, %s119
      %p131 = scmp.eq.s32.totalorder %s20, 1
      %p132 = por %p130, %p131
      %p134 = scmp.ne.s32.totalorder %s119, %s133
      %p135 = scmp.eq.s32.totalorder %s20, 0
      %p136 = por %p134, %p135
      %s138 = sadd.s32 %s137, 1
      %p141 = scmp.eq.s32.totalorder %s14, 1
      %p142 = scmp.ne.s32.totalorder %s137, %s139
      %p143 = scmp.eq.s32.totalorder %s14, 0
      %p144 = por %p142, %p143
      %p145 = scmp.ne.s32.totalorder %s137, %s139
      %p146 = scmp.eq.s32.totalorder %s19, 1
      %p147 = por %p145, %p146
      %p148 = scmp.ne.s32.totalorder %s139, %s140
      %p149 = scmp.eq.s32.totalorder %s19, 0
      %p150 = por %p148, %p149
      %p151 = scmp.ne.s32.totalorder %s139, %s140
      %p152 = scmp.eq.s32.totalorder %s20, 1
      %p153 = por %p151, %p152
      %p155 = scmp.ne.s32.totalorder %s140, %s154
      %p156 = scmp.eq.s32.totalorder %s20, 0
      %p157 = por %p155, %p156
      %s158 = ssub.s32 %s14, %s21
      %p159 = scmp.eq.s32.totalorder %s158, 0
      %s161 = sadd.s32 %s160, 1
      %s162 = scalar_select %p159, %s160, %s161
      %p165 = pneg %p159
      %p166 = scmp.eq.s32.totalorder %s14, 1
      %p167 = por %p165, %p166
      %p168 = scmp.ne.s32.totalorder %s160, %s163
      %p169 = scmp.eq.s32.totalorder %s14, 0
      %p170 = por %p168, %p169
      %p171 = scmp.ne.s32.totalorder %s160, %s163
      %p172 = scmp.eq.s32.totalorder %s19, 1
      %p173 = por %p171, %p172
      %p174 = scmp.ne.s32.totalorder %s163, %s164
      %p175 = scmp.eq.s32.totalorder %s19, 0
      %p176 = por %p174, %p175
      %p177 = scmp.ne.s32.totalorder %s163, %s164
      %p178 = scmp.eq.s32.totalorder %s20, 1
      %p179 = por %p177, %p178
      %p181 = scmp.ne.s32.totalorder %s164, %s180
      %p182 = scmp.eq.s32.totalorder %s20, 0
      %p183 = por %p181, %p182
      %p184 = scmp.le.s32.totalorder 1, %s14
      %p185 = scmp.lt.s32.totalorder %s14, 3
      %p186 = pnand %p184, %p185
      %p187 = pneg %p186
      // Predicated region
      $region9: #{gr_weight_forward.1} parent=5 // pred_check
        _
      $region10: #{gr_weight_forward.1} parent=5 // pred_check_branch
        %189 = sbr.rel (%p186) target = $region12
      $region11: #{gr_weight_forward.1} parent=5 // pred_region
        %s190 = ssub.s32 %s14, 1
        // Predicated region
        $region13: #{gr_weight_forward.1} parent=11 // pred_check
          %p191 = pneg %p87
        $region14: #{gr_weight_forward.1} parent=11 // pred_check_branch
          %193 = sbr.rel (%p191) target = $region16
        $region15: #{gr_weight_forward.1} parent=11 // pred_region
          _
        $region16: #{gr_weight_forward.1} parent=11 // pred_fallthru
          _
        // Predicated region
        $region17: #{gr_weight_forward.1} parent=11 // pred_check
          %p194 = pneg %p108
        $region18: #{gr_weight_forward.1} parent=11 // pred_check_branch
          %196 = sbr.rel (%p194) target = $region20
        $region19: #{gr_weight_forward.1} parent=11 // pred_region
          %198 = vsyncadd [#allocation5], 0
          %s199 = sshll.u32 %s3, 4
          %s200 = int_to_ptr.hbm [resolvable:$true] %s199
          %s201 = sshll.u32 [#allocation4], 4
          %s202 = int_to_ptr.vmem [resolvable:$true] %s201
          %207 = dma.hbm_to_vmem [thread:$0]  %s200, 3456, %s202, [#allocation5], 192, 192, 12
        $region20: #{gr_weight_forward.1} parent=11 // pred_fallthru
          _
        // Predicated region
        $region21: #{gr_weight_forward.1} parent=11 // pred_check
          %p208 = pneg %p129
        $region22: #{gr_weight_forward.1} parent=11 // pred_check_branch
          %210 = sbr.rel (%p208) target = $region24
        $region23: #{gr_weight_forward.1} parent=11 // pred_region
          %212 = vsyncadd [#allocation7], 0
          %s213 = sshll.u32 %s4, 4
          %s214 = int_to_ptr.hbm [resolvable:$true] %s213
          %s215 = sshll.u32 [#allocation6], 4
          %s216 = int_to_ptr.vmem [resolvable:$true] %s215
          %221 = dma.hbm_to_vmem [thread:$0]  %s214, 3072, %s216, [#allocation7], 192, 192, 12
        $region24: #{gr_weight_forward.1} parent=11 // pred_fallthru
          _
        // Predicated region
        $region25: #{gr_weight_forward.1} parent=11 // pred_check
          %p222 = pneg %p150
        $region26: #{gr_weight_forward.1} parent=11 // pred_check_branch
          %224 = sbr.rel (%p222) target = $region28
        $region27: #{gr_weight_forward.1} parent=11 // pred_region
          _
        $region28: #{gr_weight_forward.1} parent=11 // pred_fallthru
          _
      $region12: #{gr_weight_forward.1} parent=5 // pred_fallthru
        _
      %p225 = scmp.lt.s32.totalorder %s14, 2
      // Predicated region
      $region29: #{gr_weight_forward.1} parent=5 // pred_check
        %p226 = pneg %p225
      $region30: #{gr_weight_forward.1} parent=5 // pred_check_branch
        %228 = sbr.rel (%p226) target = $region32
      $region31: #{gr_weight_forward.1} parent=5 // pred_region
        // Predicated region
        $region33: #{gr_weight_forward.1} parent=31 // pred_check
          %p229 = pneg %p34
        $region34: #{gr_weight_forward.1} parent=31 // pred_check_branch
          %231 = sbr.rel (%p229) target = $region36
        $region35: #{gr_weight_forward.1} parent=31 // pred_region
          %s232 = sand.u32 %s24, 1
          %s233 = sand.u32 %s24, 1
          %s234 = smul.addr %s233, 64
          %s235 = scalar_lea.vmem [#allocation2], %s234
          %s236 = smul.addr %s14, 8
          %s237 = scalar_lea.vmem %s0, %s236
          // Predicated region
          $region37: #{gr_weight_forward.1} parent=35 // pred_check
            _
          $region38: #{gr_weight_forward.1} parent=35 // pred_check_branch
            %239 = sbr.rel (0) target = $region40
          $region39: #{gr_weight_forward.1} parent=35 // pred_region
            // Predicated region
            $region41: #{gr_weight_forward.1} parent=39 // pred_check
              _
            $region42: #{gr_weight_forward.1} parent=39 // pred_check_branch
              %241 = sbr.rel (0) target = $region44
            $region43: #{gr_weight_forward.1} parent=39 // pred_region
              // Predicated region
              $region56: #{gr_weight_forward.1} parent=43 // pred_check
                _
              $region57: #{gr_weight_forward.1} parent=43 // pred_check_branch
                %271 = sbr.rel (0) target = $region59
              $region58: #{gr_weight_forward.1} parent=43 // pred_region
                loop: start=0, step=1, limit=1
                $region60: #{gr_weight_forward.1} parent=58 // loop_pre_header
                  _
                $region61: #{gr_weight_forward.1} parent=58 // loop_header
                  %s273 = sphi 0, %s277
                  %p274 = scmp.ge.s32.totalorder %s273, 1
                  %s278 = sphi %s237, %s237
                  %s279 = sphi %s235, %s235
                $region62: #{gr_weight_forward.1} parent=58 // loop_header_branch
                  %276 = sbr.rel (%p274) target = $region66
                $region63: #{gr_weight_forward.1} parent=58 // loop_body
                  %v280 = vld [vmem:[%s278] sm:$0xff]
                  %281 = vst [vmem:[%s279] sm:$0xff] %v280
                  %v282 = vld [vmem:[%s278 + $0x10] sm:$0xff]
                  %283 = vst [vmem:[%s279 + $0x8] sm:$0xff] %v282
                  %v284 = vld [vmem:[%s278 + $0x20] sm:$0xff]
                  %285 = vst [vmem:[%s279 + $0x10] sm:$0xff] %v284
                  %v286 = vld [vmem:[%s278 + $0x30] sm:$0xff]
                  %287 = vst [vmem:[%s279 + $0x18] sm:$0xff] %v286
                  %v288 = vld [vmem:[%s278 + $0x40] sm:$0xff]
                  %289 = vst [vmem:[%s279 + $0x20] sm:$0xff] %v288
                  %v290 = vld [vmem:[%s278 + $0x50] sm:$0xff]
                  %291 = vst [vmem:[%s279 + $0x28] sm:$0xff] %v290
                  %v292 = vld [vmem:[%s278 + $0x60] sm:$0xff]
                  %293 = vst [vmem:[%s279 + $0x30] sm:$0xff] %v292
                  %v294 = vld [vmem:[%s278 + $0x70] sm:$0xff]
                  %295 = vst [vmem:[%s279 + $0x38] sm:$0xff] %v294
                $region64: #{gr_weight_forward.1} parent=58 // loop_footer
                  %s277 = sadd.s32 1, %s273
                $region65: #{gr_weight_forward.1} parent=58 // loop_footer_branch
                  %272 = sbr.rel target = $region61
                $region66: #{gr_weight_forward.1} parent=58 // loop_exit
                  _
              $region59: #{gr_weight_forward.1} parent=43 // pred_fallthru
                _
              // Predicated region
              $region67: #{gr_weight_forward.1} parent=43 // pred_check
                _
              $region68: #{gr_weight_forward.1} parent=43 // pred_check_branch
                %297 = sbr.rel target = $region70
              $region69: #{gr_weight_forward.1} parent=43 // pred_region
                _
              $region70: #{gr_weight_forward.1} parent=43 // pred_fallthru
                _
            $region44: #{gr_weight_forward.1} parent=39 // pred_fallthru
              _
            // Predicated region
            $region45: #{gr_weight_forward.1} parent=39 // pred_check
              _
            $region46: #{gr_weight_forward.1} parent=39 // pred_check_branch
              %243 = sbr.rel target = $region48
            $region47: #{gr_weight_forward.1} parent=39 // pred_region
              %s245 = ssub.s32 256, 1
              loop: start=0, step=1, limit=1
              $region49: #{gr_weight_forward.1} parent=47 // loop_pre_header
                _
              $region50: #{gr_weight_forward.1} parent=47 // loop_header
                %s247 = sphi 0, %s251
                %p248 = scmp.ge.s32.totalorder %s247, 1
                %s252 = sphi %s237, %s237
                %s253 = sphi %s235, %s235
              $region51: #{gr_weight_forward.1} parent=47 // loop_header_branch
                %250 = sbr.rel (%p248) target = $region55
              $region52: #{gr_weight_forward.1} parent=47 // loop_body
                %v254 = vld [vmem:[%s252] sm:%s245]
                %255 = vst [vmem:[%s253] sm:%s245] %v254
                %v256 = vld [vmem:[%s252 + $0x10] sm:%s245]
                %257 = vst [vmem:[%s253 + $0x8] sm:%s245] %v256
                %v258 = vld [vmem:[%s252 + $0x20] sm:%s245]
                %259 = vst [vmem:[%s253 + $0x10] sm:%s245] %v258
                %v260 = vld [vmem:[%s252 + $0x30] sm:%s245]
                %261 = vst [vmem:[%s253 + $0x18] sm:%s245] %v260
                %v262 = vld [vmem:[%s252 + $0x40] sm:%s245]
                %263 = vst [vmem:[%s253 + $0x20] sm:%s245] %v262
                %v264 = vld [vmem:[%s252 + $0x50] sm:%s245]
                %265 = vst [vmem:[%s253 + $0x28] sm:%s245] %v264
                %v266 = vld [vmem:[%s252 + $0x60] sm:%s245]
                %267 = vst [vmem:[%s253 + $0x30] sm:%s245] %v266
                %v268 = vld [vmem:[%s252 + $0x70] sm:%s245]
                %269 = vst [vmem:[%s253 + $0x38] sm:%s245] %v268
              $region53: #{gr_weight_forward.1} parent=47 // loop_footer
                %s251 = sadd.s32 1, %s247
              $region54: #{gr_weight_forward.1} parent=47 // loop_footer_branch
                %246 = sbr.rel target = $region50
              $region55: #{gr_weight_forward.1} parent=47 // loop_exit
                _
            $region48: #{gr_weight_forward.1} parent=39 // pred_fallthru
              _
          $region40: #{gr_weight_forward.1} parent=35 // pred_fallthru
            _
          %298 = vnop
        $region36: #{gr_weight_forward.1} parent=31 // pred_fallthru
          _
        // Predicated region
        $region71: #{gr_weight_forward.1} parent=31 // pred_check
          %p299 = pneg %p60
        $region72: #{gr_weight_forward.1} parent=31 // pred_check_branch
          %301 = sbr.rel (%p299) target = $region74
        $region73: #{gr_weight_forward.1} parent=31 // pred_region
          %s302 = sand.u32 %s50, 1
          %s303 = sand.u32 %s50, 1
          %s304 = smul.addr %s303, 32
          %s305 = scalar_lea.vmem [#allocation3], %s304
          %s306 = smul.addr %s14, 8
          %s307 = scalar_lea.vmem %s1, %s306
          // Predicated region
          $region75: #{gr_weight_forward.1} parent=73 // pred_check
            _
          $region76: #{gr_weight_forward.1} parent=73 // pred_check_branch
            %309 = sbr.rel (0) target = $region78
          $region77: #{gr_weight_forward.1} parent=73 // pred_region
            // Predicated region
            $region79: #{gr_weight_forward.1} parent=77 // pred_check
              _
            $region80: #{gr_weight_forward.1} parent=77 // pred_check_branch
              %311 = sbr.rel (0) target = $region82
            $region81: #{gr_weight_forward.1} parent=77 // pred_region
              // Predicated region
              $region94: #{gr_weight_forward.1} parent=81 // pred_check
                _
              $region95: #{gr_weight_forward.1} parent=81 // pred_check_branch
                %333 = sbr.rel (0) target = $region97
              $region96: #{gr_weight_forward.1} parent=81 // pred_region
                loop: start=0, step=1, limit=1
                $region98: #{gr_weight_forward.1} parent=96 // loop_pre_header
                  _
                $region99: #{gr_weight_forward.1} parent=96 // loop_header
                  %s335 = sphi 0, %s339
                  %p336 = scmp.ge.s32.totalorder %s335, 1
                  %s340 = sphi %s307, %s307
                  %s341 = sphi %s305, %s305
                $region100: #{gr_weight_forward.1} parent=96 // loop_header_branch
                  %338 = sbr.rel (%p336) target = $region104
                $region101: #{gr_weight_forward.1} parent=96 // loop_body
                  %v342 = vld [vmem:[%s340] sm:$0xff]
                  %343 = vst [vmem:[%s341] sm:$0xff] %v342
                  %v344 = vld [vmem:[%s340 + $0x10] sm:$0xff]
                  %345 = vst [vmem:[%s341 + $0x8] sm:$0xff] %v344
                  %v346 = vld [vmem:[%s340 + $0x20] sm:$0xff]
                  %347 = vst [vmem:[%s341 + $0x10] sm:$0xff] %v346
                  %v348 = vld [vmem:[%s340 + $0x30] sm:$0xff]
                  %349 = vst [vmem:[%s341 + $0x18] sm:$0xff] %v348
                $region102: #{gr_weight_forward.1} parent=96 // loop_footer
                  %s339 = sadd.s32 1, %s335
                $region103: #{gr_weight_forward.1} parent=96 // loop_footer_branch
                  %334 = sbr.rel target = $region99
                $region104: #{gr_weight_forward.1} parent=96 // loop_exit
                  _
              $region97: #{gr_weight_forward.1} parent=81 // pred_fallthru
                _
              // Predicated region
              $region105: #{gr_weight_forward.1} parent=81 // pred_check
                _
              $region106: #{gr_weight_forward.1} parent=81 // pred_check_branch
                %351 = sbr.rel target = $region108
              $region107: #{gr_weight_forward.1} parent=81 // pred_region
                _
              $region108: #{gr_weight_forward.1} parent=81 // pred_fallthru
                _
            $region82: #{gr_weight_forward.1} parent=77 // pred_fallthru
              _
            // Predicated region
            $region83: #{gr_weight_forward.1} parent=77 // pred_check
              _
            $region84: #{gr_weight_forward.1} parent=77 // pred_check_branch
              %313 = sbr.rel target = $region86
            $region85: #{gr_weight_forward.1} parent=77 // pred_region
              %s315 = ssub.s32 256, 1
              loop: start=0, step=1, limit=1
              $region87: #{gr_weight_forward.1} parent=85 // loop_pre_header
                _
              $region88: #{gr_weight_forward.1} parent=85 // loop_header
                %s317 = sphi 0, %s321
                %p318 = scmp.ge.s32.totalorder %s317, 1
                %s322 = sphi %s307, %s307
                %s323 = sphi %s305, %s305
              $region89: #{gr_weight_forward.1} parent=85 // loop_header_branch
                %320 = sbr.rel (%p318) target = $region93
              $region90: #{gr_weight_forward.1} parent=85 // loop_body
                %v324 = vld [vmem:[%s322] sm:%s315]
                %325 = vst [vmem:[%s323] sm:%s315] %v324
                %v326 = vld [vmem:[%s322 + $0x10] sm:%s315]
                %327 = vst [vmem:[%s323 + $0x8] sm:%s315] %v326
                %v328 = vld [vmem:[%s322 + $0x20] sm:%s315]
                %329 = vst [vmem:[%s323 + $0x10] sm:%s315] %v328
                %v330 = vld [vmem:[%s322 + $0x30] sm:%s315]
                %331 = vst [vmem:[%s323 + $0x18] sm:%s315] %v330
              $region91: #{gr_weight_forward.1} parent=85 // loop_footer
                %s321 = sadd.s32 1, %s317
              $region92: #{gr_weight_forward.1} parent=85 // loop_footer_branch
                %316 = sbr.rel target = $region88
              $region93: #{gr_weight_forward.1} parent=85 // loop_exit
                _
            $region86: #{gr_weight_forward.1} parent=77 // pred_fallthru
              _
          $region78: #{gr_weight_forward.1} parent=73 // pred_fallthru
            _
          %352 = vnop
        $region74: #{gr_weight_forward.1} parent=31 // pred_fallthru
          _
      $region32: #{gr_weight_forward.1} parent=5 // pred_fallthru
        _
      %p353 = scmp.le.s32.totalorder 1, %s14
      %p354 = scmp.lt.s32.totalorder %s14, 3
      %p355 = pnand %p353, %p354
      %p356 = pneg %p355
      // Predicated region
      $region109: #{gr_weight_forward.1} parent=5 // pred_check
        _
      $region110: #{gr_weight_forward.1} parent=5 // pred_check_branch
        %358 = sbr.rel (%p355) target = $region112
      $region111: #{gr_weight_forward.1} parent=5 // pred_region
        %s359 = ssub.s32 %s14, 1
        %s360 = sand.u32 %s27, 1
        %s361 = sand.u32 %s27, 1
        %s362 = smul.addr %s361, 64
        %s363 = scalar_lea.vmem [#allocation2], %s362
        // Predicated region
        $region113: #{gr_weight_forward.1} parent=111 // pred_check
          %p364 = pneg %p40
        $region114: #{gr_weight_forward.1} parent=111 // pred_check_branch
          %366 = sbr.rel (%p364) target = $region116
        $region115: #{gr_weight_forward.1} parent=111 // pred_region
          _
        $region116: #{gr_weight_forward.1} parent=111 // pred_fallthru
          _
        %s367 = sand.u32 %s53, 1
        %s368 = sand.u32 %s53, 1
        %s369 = smul.addr %s368, 32
        %s370 = scalar_lea.vmem [#allocation3], %s369
        // Predicated region
        $region117: #{gr_weight_forward.1} parent=111 // pred_check
          %p371 = pneg %p66
        $region118: #{gr_weight_forward.1} parent=111 // pred_check_branch
          %373 = sbr.rel (%p371) target = $region120
        $region119: #{gr_weight_forward.1} parent=111 // pred_region
          _
        $region120: #{gr_weight_forward.1} parent=111 // pred_fallthru
          _
        // Predicated region
        $region121: #{gr_weight_forward.1} parent=111 // pred_check
          %p374 = pneg %p108
        $region122: #{gr_weight_forward.1} parent=111 // pred_check_branch
          %376 = sbr.rel (%p374) target = $region124
        $region123: #{gr_weight_forward.1} parent=111 // pred_region
          %378 = dma.done [#allocation5], 3456
        $region124: #{gr_weight_forward.1} parent=111 // pred_fallthru
          _
        // Predicated region
        $region125: #{gr_weight_forward.1} parent=111 // pred_check
          %p379 = pneg %p129
        $region126: #{gr_weight_forward.1} parent=111 // pred_check_branch
          %381 = sbr.rel (%p379) target = $region128
        $region127: #{gr_weight_forward.1} parent=111 // pred_region
          %383 = dma.done [#allocation7], 3072
        $region128: #{gr_weight_forward.1} parent=111 // pred_fallthru
          _
        %s384 = sand.u32 %s27, 1
        %s385 = sand.u32 %s27, 1
        %s386 = smul.addr %s385, 64
        %s387 = scalar_lea.vmem [#allocation2], %s386
        %p388 = pneg %p40
        %p389 = pneg %p37
        %s390 = sand.u32 %s53, 1
        %s391 = sand.u32 %s53, 1
        %s392 = smul.addr %s391, 32
        %s393 = scalar_lea.vmem [#allocation3], %s392
        %p394 = pneg %p66
        %p395 = pneg %p63
        %p396 = pneg %p87
        %p397 = pneg %p84
        %p398 = pneg %p108
        %p399 = pneg %p105
        %p400 = pneg %p129
        %p401 = pneg %p126
        %p402 = pneg %p150
        %p403 = pneg %p147
        %p404 = pneg %p176
        %p405 = pneg %p173
        %s406 = sand.u32 %s163, 1
        %s407 = sand.u32 %s163, 1
        %s408 = smul.addr %s407, 16
        %s409 = scalar_lea.vmem [#allocation8], %s408
        %v411 = vld [vmem:[%s370] sm:$0xff]
        %s412 = scalar_lea.vmem %s370, 8 [#allocation3]
        %v413 = vld [vmem:[%s412] sm:$0xff]
        %s414 = scalar_lea.vmem %s370, 16 [#allocation3]
        %v415 = vld [vmem:[%s414] sm:$0xff]
        %s416 = scalar_lea.vmem %s370, 24 [#allocation3]
        %v417 = vld [vmem:[%s416] sm:$0xff]
        %v418 = vld [vmem:[%s2] ss:$2 sm:$0x7]
        %s419 = scalar_lea.vmem %s2, 1
        %v420 = vld [vmem:[%s419] ss:$2 sm:$0x3]
        %v421 = vld [vmem:[#allocation4] sm:$0xff]
        %v422 = vld [vmem:[#allocation4 + $0x8] sm:$0xf]
        %v423 = vld [vmem:[#allocation4 + $0xc] sm:$0xff]
        %v424 = vld [vmem:[#allocation4 + $0x14] sm:$0xf]
        %v425 = vld [vmem:[#allocation4 + $0x18] sm:$0xff]
        %v426 = vld [vmem:[#allocation4 + $0x20] sm:$0xf]
        %v427 = vld [vmem:[#allocation4 + $0x24] sm:$0xff]
        %v428 = vld [vmem:[#allocation4 + $0x2c] sm:$0xf]
        %v429 = vld [vmem:[#allocation4 + $0x30] sm:$0xff]
        %v430 = vld [vmem:[#allocation4 + $0x38] sm:$0xf]
        %v431 = vld [vmem:[#allocation4 + $0x3c] sm:$0xff]
        %v432 = vld [vmem:[#allocation4 + $0x44] sm:$0xf]
        %v433 = vld [vmem:[#allocation4 + $0x48] sm:$0xff]
        %v434 = vld [vmem:[#allocation4 + $0x50] sm:$0xf]
        %v435 = vld [vmem:[#allocation4 + $0x54] sm:$0xff]
        %v436 = vld [vmem:[#allocation4 + $0x5c] sm:$0xf]
        %v437 = vld [vmem:[#allocation4 + $0x60] sm:$0xff]
        %v438 = vld [vmem:[#allocation4 + $0x68] sm:$0xf]
        %v439 = vld [vmem:[#allocation4 + $0x6c] sm:$0xff]
        %v440 = vld [vmem:[#allocation4 + $0x74] sm:$0xf]
        %v441 = vld [vmem:[#allocation4 + $0x78] sm:$0xff]
        %v442 = vld [vmem:[#allocation4 + $0x80] sm:$0xf]
        %v443 = vld [vmem:[#allocation4 + $0x84] sm:$0xff]
        %v444 = vld [vmem:[#allocation4 + $0x8c] sm:$0xf]
        %v445 = vld [vmem:[#allocation4 + $0x90] sm:$0xff]
        %v446 = vld [vmem:[#allocation4 + $0x98] sm:$0xf]
        %v447 = vld [vmem:[#allocation4 + $0x9c] sm:$0xff]
        %v448 = vld [vmem:[#allocation4 + $0xa4] sm:$0xf]
        %v449 = vld [vmem:[#allocation4 + $0xa8] sm:$0xff]
        %v450 = vld [vmem:[#allocation4 + $0xb0] sm:$0xf]
        %v451 = vld [vmem:[#allocation4 + $0xb4] sm:$0xff]
        %v452 = vld [vmem:[#allocation4 + $0xbc] sm:$0xf]
        %v453 = vld [vmem:[#allocation4 + $0xc0] sm:$0xff]
        %v454 = vld [vmem:[#allocation4 + $0xc8] sm:$0xf]
        %v455 = vld [vmem:[#allocation4 + $0xcc] sm:$0xff]
        %v456 = vld [vmem:[#allocation4 + $0xd4] sm:$0xf]
        %v457 = vld [vmem:[#allocation6] sm:$0xff]
        %v458 = vld [vmem:[#allocation6 + $0xc] sm:$0xff]
        %v459 = vld [vmem:[#allocation6 + $0x18] sm:$0xff]
        %v460 = vld [vmem:[#allocation6 + $0x24] sm:$0xff]
        %v461 = vld [vmem:[#allocation6 + $0x30] sm:$0xff]
        %v462 = vld [vmem:[#allocation6 + $0x3c] sm:$0xff]
        %v463 = vld [vmem:[#allocation6 + $0x48] sm:$0xff]
        %v464 = vld [vmem:[#allocation6 + $0x54] sm:$0xff]
        %v465 = vld [vmem:[#allocation6 + $0x60] sm:$0xff]
        %v466 = vld [vmem:[#allocation6 + $0x6c] sm:$0xff]
        %v467 = vld [vmem:[#allocation6 + $0x78] sm:$0xff]
        %v468 = vld [vmem:[#allocation6 + $0x84] sm:$0xff]
        %v469 = vld [vmem:[#allocation6 + $0x90] sm:$0xff]
        %v470 = vld [vmem:[#allocation6 + $0x9c] sm:$0xff]
        %v471 = vld [vmem:[#allocation6 + $0xa8] sm:$0xff]
        %v472 = vld [vmem:[#allocation6 + $0xb4] sm:$0xff]
        %v473 = vld [vmem:[#allocation6 + $0x8] sm:$0xf]
        %v474 = vld [vmem:[#allocation6 + $0x14] sm:$0xf]
        %v475 = vld [vmem:[#allocation6 + $0x20] sm:$0xf]
        %v476 = vld [vmem:[#allocation6 + $0x2c] sm:$0xf]
        %v477 = vld [vmem:[#allocation6 + $0x38] sm:$0xf]
        %v478 = vld [vmem:[#allocation6 + $0x44] sm:$0xf]
        %v479 = vld [vmem:[#allocation6 + $0x50] sm:$0xf]
        %v480 = vld [vmem:[#allocation6 + $0x5c] sm:$0xf]
        %v481 = vld [vmem:[#allocation6 + $0x68] sm:$0xf]
        %v482 = vld [vmem:[#allocation6 + $0x74] sm:$0xf]
        %v483 = vld [vmem:[#allocation6 + $0x80] sm:$0xf]
        %v484 = vld [vmem:[#allocation6 + $0x8c] sm:$0xf]
        %v485 = vld [vmem:[#allocation6 + $0x98] sm:$0xf]
        %v486 = vld [vmem:[#allocation6 + $0xa4] sm:$0xf]
        %v487 = vld [vmem:[#allocation6 + $0xb0] sm:$0xf]
        %v488 = vld [vmem:[#allocation6 + $0xbc] sm:$0xf]
        %v489 = vpack.c.bf16 %v411, %v411
        %v491 = vperm.slane %v418, 0
        %v492 = vperm.slane %v418, 1
        %v493 = vperm.slane %v418, 2
        %v529 = vunpack.c.l.b16 %v425
        %v530 = vunpack.c.h.b16 %v425
        %v531 = vunpack.c.l.b16 %v426
        %v532 = vunpack.c.l.b16 %v427
        %v533 = vunpack.c.h.b16 %v427
        %v534 = vunpack.c.l.b16 %v428
        %v535 = vunpack.c.l.b16 %v429
        %v536 = vunpack.c.h.b16 %v429
        %v537 = vunpack.c.l.b16 %v430
        %v538 = vunpack.c.l.b16 %v431
        %v539 = vunpack.c.h.b16 %v431
        %v540 = vunpack.c.l.b16 %v432
        %v541 = vunpack.c.l.b16 %v433
        %v542 = vunpack.c.h.b16 %v433
        %v543 = vunpack.c.l.b16 %v434
        %v544 = vunpack.c.l.b16 %v435
        %v545 = vunpack.c.h.b16 %v435
        %v546 = vunpack.c.l.b16 %v436
        %v547 = vunpack.c.l.b16 %v437
        %v548 = vunpack.c.h.b16 %v437
        %v549 = vunpack.c.l.b16 %v438
        %v550 = vunpack.c.l.b16 %v439
        %v551 = vunpack.c.h.b16 %v439
        %v552 = vunpack.c.l.b16 %v440
        %v553 = vunpack.c.l.b16 %v441
        %v554 = vunpack.c.h.b16 %v441
        %v555 = vunpack.c.l.b16 %v442
        %v556 = vunpack.c.l.b16 %v443
        %v557 = vunpack.c.h.b16 %v443
        %v558 = vunpack.c.l.b16 %v444
        %v559 = vunpack.c.l.b16 %v445
        %v560 = vunpack.c.h.b16 %v445
        %v561 = vunpack.c.l.b16 %v446
        %v562 = vunpack.c.l.b16 %v447
        %v563 = vunpack.c.h.b16 %v447
        %v564 = vunpack.c.l.b16 %v448
        %v565 = vunpack.c.l.b16 %v449
        %v566 = vunpack.c.h.b16 %v449
        %v567 = vunpack.c.l.b16 %v450
        %v568 = vunpack.c.l.b16 %v451
        %v569 = vunpack.c.h.b16 %v451
        %v570 = vunpack.c.l.b16 %v452
        %v571 = vunpack.c.l.b16 %v453
        %v572 = vunpack.c.h.b16 %v453
        %v573 = vunpack.c.l.b16 %v454
        %v574 = vunpack.c.l.b16 %v455
        %v575 = vunpack.c.h.b16 %v455
        %v576 = vunpack.c.l.b16 %v456
        %v577 = vpack.c.b16 %v532, %v529
        %v578 = vpack.c.b16 %v533, %v530
        %v579 = vpack.c.b16 %v534, %v531
        %v580 = vpack.c.b16 %v538, %v535
        %v581 = vpack.c.b16 %v539, %v536
        %v582 = vpack.c.b16 %v540, %v537
        %v583 = vpack.c.b16 %v544, %v541
        %v584 = vpack.c.b16 %v545, %v542
        %v585 = vpack.c.b16 %v546, %v543
        %v586 = vpack.c.b16 %v550, %v547
        %v587 = vpack.c.b16 %v551, %v548
        %v588 = vpack.c.b16 %v552, %v549
        %v589 = vpack.c.b16 %v556, %v553
        %v590 = vpack.c.b16 %v557, %v554
        %v591 = vpack.c.b16 %v558, %v555
        %v592 = vpack.c.b16 %v562, %v559
        %v593 = vpack.c.b16 %v563, %v560
        %v594 = vpack.c.b16 %v564, %v561
        %v595 = vpack.c.b16 %v568, %v565
        %v596 = vpack.c.b16 %v569, %v566
        %v597 = vpack.c.b16 %v570, %v567
        %v598 = vpack.c.b16 %v574, %v571
        %v599 = vpack.c.b16 %v575, %v572
        %v600 = vpack.c.b16 %v576, %v573
        %625 = vmatpush.bf16.msra.mxu0 %v598
        %626 = vmatpush.bf16.msra.mxu0 %v595
        %627 = vmatpush.bf16.msra.mxu0 %v592
        %628 = vmatpush.bf16.msra.mxu0 %v589
        %629 = vmatpush.bf16.msra.mxu0 %v586
        %630 = vmatpush.bf16.msra.mxu0 %v583
        %631 = vmatpush.bf16.msra.mxu0 %v580
        %632 = vmatpush.bf16.msra.mxu0 %v577
        %633 = vmatmul.bf16.gmra.mxu0 %v489
        %v634 = vpop.f32.mrf.mxu0
        %v635 = vadd.f32 %v491, %v634
        %v636 = vpop.f32.mrf.mxu0
        %637 = vdwg.mxu0
        %638 = vmatpush.bf16.msra.mxu0 %v599
        %639 = vmatpush.bf16.msra.mxu0 %v596
        %640 = vmatpush.bf16.msra.mxu0 %v593
        %641 = vmatpush.bf16.msra.mxu0 %v590
        %642 = vmatpush.bf16.msra.mxu0 %v587
        %643 = vmatpush.bf16.msra.mxu0 %v584
        %644 = vmatpush.bf16.msra.mxu0 %v581
        %645 = vmatpush.bf16.msra.mxu0 %v578
        %646 = vmatmul.bf16.gmra.mxu0 %v489
        %v647 = vpop.f32.mrf.mxu0
        %v648 = vadd.f32 %v492, %v647
        %v649 = vpop.f32.mrf.mxu0
        %650 = vdwg.mxu0
        %651 = vmatpush.bf16.msra.mxu0 %v600
        %652 = vmatpush.bf16.msra.mxu0 %v597
        %653 = vmatpush.bf16.msra.mxu0 %v594
        %654 = vmatpush.bf16.msra.mxu0 %v591
        %655 = vmatpush.bf16.msra.mxu0 %v588
        %656 = vmatpush.bf16.msra.mxu0 %v585
        %657 = vmatpush.bf16.msra.mxu0 %v582
        %658 = vmatpush.bf16.msra.mxu0 %v579
        %659 = vmatmul.bf16.gmra.mxu0 %v489
        %v660 = vpop.f32.mrf.mxu0
        %v661 = vadd.f32 %v493, %v660
        %v662 = vpop.f32.mrf.mxu0
        %663 = vdwg.mxu0
        %v664 = vpack.c.bf16 %v415, %v415
        %v665 = vld [vmem:[%s5 + $0x80] sm:$0xff]
        %v666 = vld [vmem:[%s5 + $0x88] sm:$0xff]
        %v667 = vld [vmem:[%s5 + $0x90] sm:$0xff]
        %v668 = vld [vmem:[%s5 + $0x98] sm:$0xff]
        %v669 = vld [vmem:[%s5 + $0xa0] sm:$0xff]
        %v670 = vld [vmem:[%s5 + $0xa8] sm:$0xff]
        %v671 = vld [vmem:[%s5 + $0xb0] sm:$0xff]
        %v672 = vld [vmem:[%s5 + $0xb8] sm:$0xff]
        %v673 = vld [vmem:[%s5 + $0xc0] sm:$0xff]
        %v674 = vld [vmem:[%s5 + $0xc8] sm:$0xff]
        %v675 = vld [vmem:[%s5 + $0xd0] sm:$0xff]
        %v676 = vld [vmem:[%s5 + $0xd8] sm:$0xff]
        %v677 = vld [vmem:[%s5 + $0xe0] sm:$0xff]
        %v678 = vld [vmem:[%s5 + $0xe8] sm:$0xff]
        %v679 = vld [vmem:[%s5 + $0xf0] sm:$0xff]
        %v680 = vld [vmem:[%s5 + $0xf8] sm:$0xff]
        %v697 = vunpack.c.l.b16 %v665
        %v698 = vunpack.c.h.b16 %v665
        %v699 = vunpack.c.l.b16 %v666
        %v700 = vunpack.c.h.b16 %v666
        %v701 = vunpack.c.l.b16 %v667
        %v702 = vunpack.c.h.b16 %v667
        %v703 = vunpack.c.l.b16 %v668
        %v704 = vunpack.c.h.b16 %v668
        %v705 = vunpack.c.l.b16 %v669
        %v706 = vunpack.c.h.b16 %v669
        %v707 = vunpack.c.l.b16 %v670
        %v708 = vunpack.c.h.b16 %v670
        %v709 = vunpack.c.l.b16 %v671
        %v710 = vunpack.c.h.b16 %v671
        %v711 = vunpack.c.l.b16 %v672
        %v712 = vunpack.c.h.b16 %v672
        %v713 = vunpack.c.l.b16 %v673
        %v714 = vunpack.c.h.b16 %v673
        %v715 = vunpack.c.l.b16 %v674
        %v716 = vunpack.c.h.b16 %v674
        %v717 = vunpack.c.l.b16 %v675
        %v718 = vunpack.c.h.b16 %v675
        %v719 = vunpack.c.l.b16 %v676
        %v720 = vunpack.c.h.b16 %v676
        %v721 = vunpack.c.l.b16 %v677
        %v722 = vunpack.c.h.b16 %v677
        %v723 = vunpack.c.l.b16 %v678
        %v724 = vunpack.c.h.b16 %v678
        %v725 = vunpack.c.l.b16 %v679
        %v726 = vunpack.c.h.b16 %v679
        %v727 = vunpack.c.l.b16 %v680
        %v728 = vunpack.c.h.b16 %v680
        %v729 = vpack.c.b16 %v699, %v697
        %v730 = vpack.c.b16 %v700, %v698
        %v731 = vpack.c.b16 %v703, %v701
        %v732 = vpack.c.b16 %v704, %v702
        %v733 = vpack.c.b16 %v707, %v705
        %v734 = vpack.c.b16 %v708, %v706
        %v735 = vpack.c.b16 %v711, %v709
        %v736 = vpack.c.b16 %v712, %v710
        %v737 = vpack.c.b16 %v715, %v713
        %v738 = vpack.c.b16 %v716, %v714
        %v739 = vpack.c.b16 %v719, %v717
        %v740 = vpack.c.b16 %v720, %v718
        %v741 = vpack.c.b16 %v723, %v721
        %v742 = vpack.c.b16 %v724, %v722
        %v743 = vpack.c.b16 %v727, %v725
        %v744 = vpack.c.b16 %v728, %v726
        %761 = vmatpush.bf16.msra.mxu0 %v743
        %762 = vmatpush.bf16.msra.mxu0 %v741
        %763 = vmatpush.bf16.msra.mxu0 %v739
        %764 = vmatpush.bf16.msra.mxu0 %v737
        %765 = vmatpush.bf16.msra.mxu0 %v735
        %766 = vmatpush.bf16.msra.mxu0 %v733
        %767 = vmatpush.bf16.msra.mxu0 %v731
        %768 = vmatpush.bf16.msra.mxu0 %v729
        %769 = vmatmul.bf16.gmra.mxu0 %v664
        %v770 = vpop.f32.mrf.mxu0
        %v771 = vadd.f32 0.0, %v770
        %v772 = vpop.f32.mrf.mxu0
        %773 = vdwg.mxu0
        %774 = vmatpush.bf16.msra.mxu0 %v744
        %775 = vmatpush.bf16.msra.mxu0 %v742
        %776 = vmatpush.bf16.msra.mxu0 %v740
        %777 = vmatpush.bf16.msra.mxu0 %v738
        %778 = vmatpush.bf16.msra.mxu0 %v736
        %779 = vmatpush.bf16.msra.mxu0 %v734
        %780 = vmatpush.bf16.msra.mxu0 %v732
        %781 = vmatpush.bf16.msra.mxu0 %v730
        %782 = vmatmul.bf16.gmra.mxu0 %v664
        %v783 = vpop.f32.mrf.mxu0
        %v784 = vadd.f32 0.0, %v783
        %v785 = vpop.f32.mrf.mxu0
        %786 = vdwg.mxu0
        %v787 = vld [vmem:[%s363] sm:$0xff]
        %v788 = vpack.c.bf16 %v787, %v787
        %v793 = vunpack.c.l.b16 %v421
        %v794 = vunpack.c.h.b16 %v421
        %v795 = vunpack.c.l.b16 %v422
        %v796 = vunpack.c.l.b16 %v423
        %v797 = vunpack.c.h.b16 %v423
        %v798 = vunpack.c.l.b16 %v424
        %v799 = vpack.c.b16 %v796, %v793
        %v800 = vpack.c.b16 %v797, %v794
        %v801 = vpack.c.b16 %v798, %v795
        %vm805 = vcmask 130048
        %v807 = vsel %vm805, %v788, 0
        %809 = vmatpush.bf16.msra.mxu0 0
        %810 = vmatpush.bf16.msra.mxu0 0
        %811 = vmatpush.bf16.msra.mxu0 0
        %812 = vmatpush.bf16.msra.mxu0 0
        %813 = vmatpush.bf16.msra.mxu0 0
        %814 = vmatpush.bf16.msra.mxu0 0
        %815 = vmatpush.bf16.msra.mxu0 0
        %816 = vmatpush.bf16.msra.mxu0 %v799
        %817 = vmatmul.bf16.gmra.mxu0 %v807
        %v818 = vpop.f32.mrf.mxu0
        %v819 = vadd.f32 %v635, %v818
        %v820 = vpop.f32.mrf.mxu0
        %821 = vdwg.mxu0
        %822 = vmatpush.bf16.msra.mxu0 0
        %823 = vmatpush.bf16.msra.mxu0 0
        %824 = vmatpush.bf16.msra.mxu0 0
        %825 = vmatpush.bf16.msra.mxu0 0
        %826 = vmatpush.bf16.msra.mxu0 0
        %827 = vmatpush.bf16.msra.mxu0 0
        %828 = vmatpush.bf16.msra.mxu0 0
        %829 = vmatpush.bf16.msra.mxu0 %v800
        %830 = vmatmul.bf16.gmra.mxu0 %v807
        %v831 = vpop.f32.mrf.mxu0
        %v832 = vadd.f32 %v648, %v831
        %v833 = vpop.f32.mrf.mxu0
        %834 = vdwg.mxu0
        %835 = vmatpush.bf16.msra.mxu0 0
        %836 = vmatpush.bf16.msra.mxu0 0
        %837 = vmatpush.bf16.msra.mxu0 0
        %838 = vmatpush.bf16.msra.mxu0 0
        %839 = vmatpush.bf16.msra.mxu0 0
        %840 = vmatpush.bf16.msra.mxu0 0
        %841 = vmatpush.bf16.msra.mxu0 0
        %842 = vmatpush.bf16.msra.mxu0 %v801
        %843 = vmatmul.bf16.gmra.mxu0 %v807
        %v844 = vpop.f32.mrf.mxu0
        %v845 = vadd.f32 %v661, %v844
        %v846 = vpop.f32.mrf.mxu0
        %847 = vdwg.mxu0
        %v848 = vpack.c.bf16 %v413, %v413
        %v865 = vunpack.c.l.b16 %v457
        %v866 = vunpack.c.h.b16 %v457
        %v867 = vunpack.c.l.b16 %v458
        %v868 = vunpack.c.h.b16 %v458
        %v869 = vunpack.c.l.b16 %v459
        %v870 = vunpack.c.h.b16 %v459
        %v871 = vunpack.c.l.b16 %v460
        %v872 = vunpack.c.h.b16 %v460
        %v873 = vunpack.c.l.b16 %v461
        %v874 = vunpack.c.h.b16 %v461
        %v875 = vunpack.c.l.b16 %v462
        %v876 = vunpack.c.h.b16 %v462
        %v877 = vunpack.c.l.b16 %v463
        %v878 = vunpack.c.h.b16 %v463
        %v879 = vunpack.c.l.b16 %v464
        %v880 = vunpack.c.h.b16 %v464
        %v881 = vunpack.c.l.b16 %v465
        %v882 = vunpack.c.h.b16 %v465
        %v883 = vunpack.c.l.b16 %v466
        %v884 = vunpack.c.h.b16 %v466
        %v885 = vunpack.c.l.b16 %v467
        %v886 = vunpack.c.h.b16 %v467
        %v887 = vunpack.c.l.b16 %v468
        %v888 = vunpack.c.h.b16 %v468
        %v889 = vunpack.c.l.b16 %v469
        %v890 = vunpack.c.h.b16 %v469
        %v891 = vunpack.c.l.b16 %v470
        %v892 = vunpack.c.h.b16 %v470
        %v893 = vunpack.c.l.b16 %v471
        %v894 = vunpack.c.h.b16 %v471
        %v895 = vunpack.c.l.b16 %v472
        %v896 = vunpack.c.h.b16 %v472
        %v897 = vpack.c.b16 %v867, %v865
        %v898 = vpack.c.b16 %v868, %v866
        %v899 = vpack.c.b16 %v871, %v869
        %v900 = vpack.c.b16 %v872, %v870
        %v901 = vpack.c.b16 %v875, %v873
        %v902 = vpack.c.b16 %v876, %v874
        %v903 = vpack.c.b16 %v879, %v877
        %v904 = vpack.c.b16 %v880, %v878
        %v905 = vpack.c.b16 %v883, %v881
        %v906 = vpack.c.b16 %v884, %v882
        %v907 = vpack.c.b16 %v887, %v885
        %v908 = vpack.c.b16 %v888, %v886
        %v909 = vpack.c.b16 %v891, %v889
        %v910 = vpack.c.b16 %v892, %v890
        %v911 = vpack.c.b16 %v895, %v893
        %v912 = vpack.c.b16 %v896, %v894
        %929 = vmatpush.bf16.msra.mxu0 %v911
        %930 = vmatpush.bf16.msra.mxu0 %v909
        %931 = vmatpush.bf16.msra.mxu0 %v907
        %932 = vmatpush.bf16.msra.mxu0 %v905
        %933 = vmatpush.bf16.msra.mxu0 %v903
        %934 = vmatpush.bf16.msra.mxu0 %v901
        %935 = vmatpush.bf16.msra.mxu0 %v899
        %936 = vmatpush.bf16.msra.mxu0 %v897
        %937 = vmatmul.bf16.gmra.mxu0 %v848
        %v938 = vpop.f32.mrf.mxu0
        %v939 = vadd.f32 0.0, %v938
        %v940 = vpop.f32.mrf.mxu0
        %941 = vdwg.mxu0
        %942 = vmatpush.bf16.msra.mxu0 %v912
        %943 = vmatpush.bf16.msra.mxu0 %v910
        %944 = vmatpush.bf16.msra.mxu0 %v908
        %945 = vmatpush.bf16.msra.mxu0 %v906
        %946 = vmatpush.bf16.msra.mxu0 %v904
        %947 = vmatpush.bf16.msra.mxu0 %v902
        %948 = vmatpush.bf16.msra.mxu0 %v900
        %949 = vmatpush.bf16.msra.mxu0 %v898
        %950 = vmatmul.bf16.gmra.mxu0 %v848
        %v951 = vpop.f32.mrf.mxu0
        %v952 = vadd.f32 0.0, %v951
        %v953 = vpop.f32.mrf.mxu0
        %954 = vdwg.mxu0
        %v955 = vadd.f32 %v819, %v939
        %v956 = vxor.u32 %v955, 2147483648
        %v957 = vmul.f32 %v956, 1.442695
        %v958 = vpow.pop %v957
        %v959 = vadd.f32 %v958, 1.0
        %v960 = vrcp.pop %v959
        %v961 = vmul.f32 %v959, %v960
        %v962 = vsub.f32 1.0, %v961
        %v963 = vmul.f32 %v960, %v962
        %v964 = vadd.f32 %v960, %v963
        %vm965 = vweird.f32 %v959
        %vm966 = vweird.f32 %v960
        %vm967 = vmor %vm965, %vm966
        %v968 = vsel %vm967, %v960, %v964
        %v969 = vand.u32 2147483647, %v959
        %vm970 = vcmp.eq.f32.partialorder %v969, 8.507059e+37
        %v971 = vand.u32 %v959, 2147483648
        %v972 = vor.u32 1.1754944e-38, %v971
        %v973 = vsel %vm970, %v972, %v968
        %v974 = vmul.f32 1.0, %v973
        %v975 = vadd.f32 %v832, %v952
        %v976 = vxor.u32 %v975, 2147483648
        %v977 = vmul.f32 %v976, 1.442695
        %v978 = vpow.pop %v977
        %v979 = vadd.f32 %v978, 1.0
        %v980 = vrcp.pop %v979
        %v981 = vmul.f32 %v979, %v980
        %v982 = vsub.f32 1.0, %v981
        %v983 = vmul.f32 %v980, %v982
        %v984 = vadd.f32 %v980, %v983
        %vm985 = vweird.f32 %v979
        %vm986 = vweird.f32 %v980
        %vm987 = vmor %vm985, %vm986
        %v988 = vsel %vm987, %v980, %v984
        %v989 = vand.u32 2147483647, %v979
        %vm990 = vcmp.eq.f32.partialorder %v989, 8.507059e+37
        %v991 = vand.u32 %v979, 2147483648
        %v992 = vor.u32 1.1754944e-38, %v991
        %v993 = vsel %vm990, %v992, %v988
        %v994 = vmul.f32 1.0, %v993
        %v995 = vmul.f32 %v994, %v413
        %v996 = vpack.c.bf16 %v995, %v995
        %v1013 = vunpack.c.l.b16 %v473
        %v1014 = vunpack.c.l.b16 %v474
        %v1015 = vunpack.c.l.b16 %v475
        %v1016 = vunpack.c.l.b16 %v476
        %v1017 = vunpack.c.l.b16 %v477
        %v1018 = vunpack.c.l.b16 %v478
        %v1019 = vunpack.c.l.b16 %v479
        %v1020 = vunpack.c.l.b16 %v480
        %v1021 = vunpack.c.l.b16 %v481
        %v1022 = vunpack.c.l.b16 %v482
        %v1023 = vunpack.c.l.b16 %v483
        %v1024 = vunpack.c.l.b16 %v484
        %v1025 = vunpack.c.l.b16 %v485
        %v1026 = vunpack.c.l.b16 %v486
        %v1027 = vunpack.c.l.b16 %v487
        %v1028 = vunpack.c.l.b16 %v488
        %v1029 = vpack.c.b16 %v1014, %v1013
        %v1030 = vpack.c.b16 %v1016, %v1015
        %v1031 = vpack.c.b16 %v1018, %v1017
        %v1032 = vpack.c.b16 %v1020, %v1019
        %v1033 = vpack.c.b16 %v1022, %v1021
        %v1034 = vpack.c.b16 %v1024, %v1023
        %v1035 = vpack.c.b16 %v1026, %v1025
        %v1036 = vpack.c.b16 %v1028, %v1027
        %1045 = vmatpush.bf16.msra.mxu0 %v1036
        %1046 = vmatpush.bf16.msra.mxu0 %v1035
        %1047 = vmatpush.bf16.msra.mxu0 %v1034
        %1048 = vmatpush.bf16.msra.mxu0 %v1033
        %1049 = vmatpush.bf16.msra.mxu0 %v1032
        %1050 = vmatpush.bf16.msra.mxu0 %v1031
        %1051 = vmatpush.bf16.msra.mxu0 %v1030
        %1052 = vmatpush.bf16.msra.mxu0 %v1029
        %1053 = vmatmul.bf16.gmra.mxu0 %v996
        %v1054 = vpop.f32.mrf.mxu0
        %v1055 = vadd.f32 0.0, %v1054
        %v1056 = vpop.f32.mrf.mxu0
        %1057 = vdwg.mxu0
        %v1058 = vadd.f32 %v845, %v1055
        %v1059 = vtanh.pop %v1058
        %v1060 = vmul.f32 %v1059, %v415
        %v1061 = vsub.f32 %v1060, %v413
        %v1062 = vmul.f32 %v974, %v1061
        %v1063 = vadd.f32 %v413, %v1062
        %s1064 = scalar_lea.vmem %s363, 8 [#allocation2]
        %v1065 = vld [vmem:[%s1064] sm:$0xff]
        %v1066 = vpack.c.bf16 %v1065, %v1065
        %v1068 = vsel %vm805, %v1066, 0
        %1070 = vmatpush.bf16.msra.mxu0 0
        %1071 = vmatpush.bf16.msra.mxu0 0
        %1072 = vmatpush.bf16.msra.mxu0 0
        %1073 = vmatpush.bf16.msra.mxu0 0
        %1074 = vmatpush.bf16.msra.mxu0 0
        %1075 = vmatpush.bf16.msra.mxu0 0
        %1076 = vmatpush.bf16.msra.mxu0 0
        %1077 = vmatpush.bf16.msra.mxu0 %v799
        %1078 = vmatmul.bf16.gmra.mxu0 %v1068
        %v1079 = vpop.f32.mrf.mxu0
        %v1080 = vadd.f32 %v635, %v1079
        %v1081 = vpop.f32.mrf.mxu0
        %1082 = vdwg.mxu0
        %1083 = vmatpush.bf16.msra.mxu0 0
        %1084 = vmatpush.bf16.msra.mxu0 0
        %1085 = vmatpush.bf16.msra.mxu0 0
        %1086 = vmatpush.bf16.msra.mxu0 0
        %1087 = vmatpush.bf16.msra.mxu0 0
        %1088 = vmatpush.bf16.msra.mxu0 0
        %1089 = vmatpush.bf16.msra.mxu0 0
        %1090 = vmatpush.bf16.msra.mxu0 %v800
        %1091 = vmatmul.bf16.gmra.mxu0 %v1068
        %v1092 = vpop.f32.mrf.mxu0
        %v1093 = vadd.f32 %v648, %v1092
        %v1094 = vpop.f32.mrf.mxu0
        %1095 = vdwg.mxu0
        %1096 = vmatpush.bf16.msra.mxu0 0
        %1097 = vmatpush.bf16.msra.mxu0 0
        %1098 = vmatpush.bf16.msra.mxu0 0
        %1099 = vmatpush.bf16.msra.mxu0 0
        %1100 = vmatpush.bf16.msra.mxu0 0
        %1101 = vmatpush.bf16.msra.mxu0 0
        %1102 = vmatpush.bf16.msra.mxu0 0
        %1103 = vmatpush.bf16.msra.mxu0 %v801
        %1104 = vmatmul.bf16.gmra.mxu0 %v1068
        %v1105 = vpop.f32.mrf.mxu0
        %v1106 = vadd.f32 %v661, %v1105
        %v1107 = vpop.f32.mrf.mxu0
        %1108 = vdwg.mxu0
        %v1109 = vpack.c.bf16 %v1063, %v1063
        %1110 = vmatpush.bf16.msra.mxu0 %v911
        %1111 = vmatpush.bf16.msra.mxu0 %v909
        %1112 = vmatpush.bf16.msra.mxu0 %v907
        %1113 = vmatpush.bf16.msra.mxu0 %v905
        %1114 = vmatpush.bf16.msra.mxu0 %v903
        %1115 = vmatpush.bf16.msra.mxu0 %v901
        %1116 = vmatpush.bf16.msra.mxu0 %v899
        %1117 = vmatpush.bf16.msra.mxu0 %v897
        %1118 = vmatmul.bf16.gmra.mxu0 %v1109
        %v1119 = vpop.f32.mrf.mxu0
        %v1120 = vadd.f32 0.0, %v1119
        %v1121 = vpop.f32.mrf.mxu0
        %1122 = vdwg.mxu0
        %1123 = vmatpush.bf16.msra.mxu0 %v912
        %1124 = vmatpush.bf16.msra.mxu0 %v910
        %1125 = vmatpush.bf16.msra.mxu0 %v908
        %1126 = vmatpush.bf16.msra.mxu0 %v906
        %1127 = vmatpush.bf16.msra.mxu0 %v904
        %1128 = vmatpush.bf16.msra.mxu0 %v902
        %1129 = vmatpush.bf16.msra.mxu0 %v900
        %1130 = vmatpush.bf16.msra.mxu0 %v898
        %1131 = vmatmul.bf16.gmra.mxu0 %v1109
        %v1132 = vpop.f32.mrf.mxu0
        %v1133 = vadd.f32 0.0, %v1132
        %v1134 = vpop.f32.mrf.mxu0
        %1135 = vdwg.mxu0
        %v1136 = vadd.f32 %v1080, %v1120
        %v1137 = vxor.u32 %v1136, 2147483648
        %v1138 = vmul.f32 %v1137, 1.442695
        %v1139 = vpow.pop %v1138
        %v1140 = vadd.f32 %v1139, 1.0
        %v1141 = vrcp.pop %v1140
        %v1142 = vmul.f32 %v1140, %v1141
        %v1143 = vsub.f32 1.0, %v1142
        %v1144 = vmul.f32 %v1141, %v1143
        %v1145 = vadd.f32 %v1141, %v1144
        %vm1146 = vweird.f32 %v1140
        %vm1147 = vweird.f32 %v1141
        %vm1148 = vmor %vm1146, %vm1147
        %v1149 = vsel %vm1148, %v1141, %v1145
        %v1150 = vand.u32 2147483647, %v1140
        %vm1151 = vcmp.eq.f32.partialorder %v1150, 8.507059e+37
        %v1152 = vand.u32 %v1140, 2147483648
        %v1153 = vor.u32 1.1754944e-38, %v1152
        %v1154 = vsel %vm1151, %v1153, %v1149
        %v1155 = vmul.f32 1.0, %v1154
        %v1156 = vadd.f32 %v1093, %v1133
        %v1157 = vxor.u32 %v1156, 2147483648
        %v1158 = vmul.f32 %v1157, 1.442695
        %v1159 = vpow.pop %v1158
        %v1160 = vadd.f32 %v1159, 1.0
        %v1161 = vrcp.pop %v1160
        %v1162 = vmul.f32 %v1160, %v1161
        %v1163 = vsub.f32 1.0, %v1162
        %v1164 = vmul.f32 %v1161, %v1163
        %v1165 = vadd.f32 %v1161, %v1164
        %vm1166 = vweird.f32 %v1160
        %vm1167 = vweird.f32 %v1161
        %vm1168 = vmor %vm1166, %vm1167
        %v1169 = vsel %vm1168, %v1161, %v1165
        %v1170 = vand.u32 2147483647, %v1160
        %vm1171 = vcmp.eq.f32.partialorder %v1170, 8.507059e+37
        %v1172 = vand.u32 %v1160, 2147483648
        %v1173 = vor.u32 1.1754944e-38, %v1172
        %v1174 = vsel %vm1171, %v1173, %v1169
        %v1175 = vmul.f32 1.0, %v1174
        %v1176 = vmul.f32 %v1175, %v1063
        %v1177 = vpack.c.bf16 %v1176, %v1176
        %1178 = vmatpush.bf16.msra.mxu0 %v1036
        %1179 = vmatpush.bf16.msra.mxu0 %v1035
        %1180 = vmatpush.bf16.msra.mxu0 %v1034
        %1181 = vmatpush.bf16.msra.mxu0 %v1033
        %1182 = vmatpush.bf16.msra.mxu0 %v1032
        %1183 = vmatpush.bf16.msra.mxu0 %v1031
        %1184 = vmatpush.bf16.msra.mxu0 %v1030
        %1185 = vmatpush.bf16.msra.mxu0 %v1029
        %1186 = vmatmul.bf16.gmra.mxu0 %v1177
        %v1187 = vpop.f32.mrf.mxu0
        %v1188 = vadd.f32 0.0, %v1187
        %v1189 = vpop.f32.mrf.mxu0
        %1190 = vdwg.mxu0
        %v1191 = vadd.f32 %v1106, %v1188
        %v1192 = vtanh.pop %v1191
        %v1193 = vmul.f32 %v1192, %v415
        %v1194 = vsub.f32 %v1193, %v1063
        %v1195 = vmul.f32 %v1155, %v1194
        %v1196 = vadd.f32 %v1063, %v1195
        %s1197 = scalar_lea.vmem %s363, 16 [#allocation2]
        %v1198 = vld [vmem:[%s1197] sm:$0xff]
        %v1199 = vpack.c.bf16 %v1198, %v1198
        %v1201 = vsel %vm805, %v1199, 0
        %1203 = vmatpush.bf16.msra.mxu0 0
        %1204 = vmatpush.bf16.msra.mxu0 0
        %1205 = vmatpush.bf16.msra.mxu0 0
        %1206 = vmatpush.bf16.msra.mxu0 0
        %1207 = vmatpush.bf16.msra.mxu0 0
        %1208 = vmatpush.bf16.msra.mxu0 0
        %1209 = vmatpush.bf16.msra.mxu0 0
        %1210 = vmatpush.bf16.msra.mxu0 %v799
        %1211 = vmatmul.bf16.gmra.mxu0 %v1201
        %v1212 = vpop.f32.mrf.mxu0
        %v1213 = vadd.f32 %v635, %v1212
        %v1214 = vpop.f32.mrf.mxu0
        %1215 = vdwg.mxu0
        %1216 = vmatpush.bf16.msra.mxu0 0
        %1217 = vmatpush.bf16.msra.mxu0 0
        %1218 = vmatpush.bf16.msra.mxu0 0
        %1219 = vmatpush.bf16.msra.mxu0 0
        %1220 = vmatpush.bf16.msra.mxu0 0
        %1221 = vmatpush.bf16.msra.mxu0 0
        %1222 = vmatpush.bf16.msra.mxu0 0
        %1223 = vmatpush.bf16.msra.mxu0 %v800
        %1224 = vmatmul.bf16.gmra.mxu0 %v1201
        %v1225 = vpop.f32.mrf.mxu0
        %v1226 = vadd.f32 %v648, %v1225
        %v1227 = vpop.f32.mrf.mxu0
        %1228 = vdwg.mxu0
        %1229 = vmatpush.bf16.msra.mxu0 0
        %1230 = vmatpush.bf16.msra.mxu0 0
        %1231 = vmatpush.bf16.msra.mxu0 0
        %1232 = vmatpush.bf16.msra.mxu0 0
        %1233 = vmatpush.bf16.msra.mxu0 0
        %1234 = vmatpush.bf16.msra.mxu0 0
        %1235 = vmatpush.bf16.msra.mxu0 0
        %1236 = vmatpush.bf16.msra.mxu0 %v801
        %1237 = vmatmul.bf16.gmra.mxu0 %v1201
        %v1238 = vpop.f32.mrf.mxu0
        %v1239 = vadd.f32 %v661, %v1238
        %v1240 = vpop.f32.mrf.mxu0
        %1241 = vdwg.mxu0
        %v1242 = vpack.c.bf16 %v1196, %v1196
        %1243 = vmatpush.bf16.msra.mxu0 %v911
        %1244 = vmatpush.bf16.msra.mxu0 %v909
        %1245 = vmatpush.bf16.msra.mxu0 %v907
        %1246 = vmatpush.bf16.msra.mxu0 %v905
        %1247 = vmatpush.bf16.msra.mxu0 %v903
        %1248 = vmatpush.bf16.msra.mxu0 %v901
        %1249 = vmatpush.bf16.msra.mxu0 %v899
        %1250 = vmatpush.bf16.msra.mxu0 %v897
        %1251 = vmatmul.bf16.gmra.mxu0 %v1242
        %v1252 = vpop.f32.mrf.mxu0
        %v1253 = vadd.f32 0.0, %v1252
        %v1254 = vpop.f32.mrf.mxu0
        %1255 = vdwg.mxu0
        %1256 = vmatpush.bf16.msra.mxu0 %v912
        %1257 = vmatpush.bf16.msra.mxu0 %v910
        %1258 = vmatpush.bf16.msra.mxu0 %v908
        %1259 = vmatpush.bf16.msra.mxu0 %v906
        %1260 = vmatpush.bf16.msra.mxu0 %v904
        %1261 = vmatpush.bf16.msra.mxu0 %v902
        %1262 = vmatpush.bf16.msra.mxu0 %v900
        %1263 = vmatpush.bf16.msra.mxu0 %v898
        %1264 = vmatmul.bf16.gmra.mxu0 %v1242
        %v1265 = vpop.f32.mrf.mxu0
        %v1266 = vadd.f32 0.0, %v1265
        %v1267 = vpop.f32.mrf.mxu0
        %1268 = vdwg.mxu0
        %v1269 = vadd.f32 %v1213, %v1253
        %v1270 = vxor.u32 %v1269, 2147483648
        %v1271 = vmul.f32 %v1270, 1.442695
        %v1272 = vpow.pop %v1271
        %v1273 = vadd.f32 %v1272, 1.0
        %v1274 = vrcp.pop %v1273
        %v1275 = vmul.f32 %v1273, %v1274
        %v1276 = vsub.f32 1.0, %v1275
        %v1277 = vmul.f32 %v1274, %v1276
        %v1278 = vadd.f32 %v1274, %v1277
        %vm1279 = vweird.f32 %v1273
        %vm1280 = vweird.f32 %v1274
        %vm1281 = vmor %vm1279, %vm1280
        %v1282 = vsel %vm1281, %v1274, %v1278
        %v1283 = vand.u32 2147483647, %v1273
        %vm1284 = vcmp.eq.f32.partialorder %v1283, 8.507059e+37
        %v1285 = vand.u32 %v1273, 2147483648
        %v1286 = vor.u32 1.1754944e-38, %v1285
        %v1287 = vsel %vm1284, %v1286, %v1282
        %v1288 = vmul.f32 1.0, %v1287
        %v1289 = vadd.f32 %v1226, %v1266
        %v1290 = vxor.u32 %v1289, 2147483648
        %v1291 = vmul.f32 %v1290, 1.442695
        %v1292 = vpow.pop %v1291
        %v1293 = vadd.f32 %v1292, 1.0
        %v1294 = vrcp.pop %v1293
        %v1295 = vmul.f32 %v1293, %v1294
        %v1296 = vsub.f32 1.0, %v1295
        %v1297 = vmul.f32 %v1294, %v1296
        %v1298 = vadd.f32 %v1294, %v1297
        %vm1299 = vweird.f32 %v1293
        %vm1300 = vweird.f32 %v1294
        %vm1301 = vmor %vm1299, %vm1300
        %v1302 = vsel %vm1301, %v1294, %v1298
        %v1303 = vand.u32 2147483647, %v1293
        %vm1304 = vcmp.eq.f32.partialorder %v1303, 8.507059e+37
        %v1305 = vand.u32 %v1293, 2147483648
        %v1306 = vor.u32 1.1754944e-38, %v1305
        %v1307 = vsel %vm1304, %v1306, %v1302
        %v1308 = vmul.f32 1.0, %v1307
        %v1309 = vmul.f32 %v1308, %v1196
        %v1310 = vpack.c.bf16 %v1309, %v1309
        %1311 = vmatpush.bf16.msra.mxu0 %v1036
        %1312 = vmatpush.bf16.msra.mxu0 %v1035
        %1313 = vmatpush.bf16.msra.mxu0 %v1034
        %1314 = vmatpush.bf16.msra.mxu0 %v1033
        %1315 = vmatpush.bf16.msra.mxu0 %v1032
        %1316 = vmatpush.bf16.msra.mxu0 %v1031
        %1317 = vmatpush.bf16.msra.mxu0 %v1030
        %1318 = vmatpush.bf16.msra.mxu0 %v1029
        %1319 = vmatmul.bf16.gmra.mxu0 %v1310
        %v1320 = vpop.f32.mrf.mxu0
        %v1321 = vadd.f32 0.0, %v1320
        %v1322 = vpop.f32.mrf.mxu0
        %1323 = vdwg.mxu0
        %v1324 = vadd.f32 %v1239, %v1321
        %v1325 = vtanh.pop %v1324
        %v1326 = vmul.f32 %v1325, %v415
        %v1327 = vsub.f32 %v1326, %v1196
        %v1328 = vmul.f32 %v1288, %v1327
        %v1329 = vadd.f32 %v1196, %v1328
        %s1330 = scalar_lea.vmem %s363, 24 [#allocation2]
        %v1331 = vld [vmem:[%s1330] sm:$0xff]
        %v1332 = vpack.c.bf16 %v1331, %v1331
        %v1334 = vsel %vm805, %v1332, 0
        %1336 = vmatpush.bf16.msra.mxu0 0
        %1337 = vmatpush.bf16.msra.mxu0 0
        %1338 = vmatpush.bf16.msra.mxu0 0
        %1339 = vmatpush.bf16.msra.mxu0 0
        %1340 = vmatpush.bf16.msra.mxu0 0
        %1341 = vmatpush.bf16.msra.mxu0 0
        %1342 = vmatpush.bf16.msra.mxu0 0
        %1343 = vmatpush.bf16.msra.mxu0 %v799
        %1344 = vmatmul.bf16.gmra.mxu0 %v1334
        %v1345 = vpop.f32.mrf.mxu0
        %v1346 = vadd.f32 %v635, %v1345
        %v1347 = vpop.f32.mrf.mxu0
        %1348 = vdwg.mxu0
        %1349 = vmatpush.bf16.msra.mxu0 0
        %1350 = vmatpush.bf16.msra.mxu0 0
        %1351 = vmatpush.bf16.msra.mxu0 0
        %1352 = vmatpush.bf16.msra.mxu0 0
        %1353 = vmatpush.bf16.msra.mxu0 0
        %1354 = vmatpush.bf16.msra.mxu0 0
        %1355 = vmatpush.bf16.msra.mxu0 0
        %1356 = vmatpush.bf16.msra.mxu0 %v800
        %1357 = vmatmul.bf16.gmra.mxu0 %v1334
        %v1358 = vpop.f32.mrf.mxu0
        %v1359 = vadd.f32 %v648, %v1358
        %v1360 = vpop.f32.mrf.mxu0
        %1361 = vdwg.mxu0
        %1362 = vmatpush.bf16.msra.mxu0 0
        %1363 = vmatpush.bf16.msra.mxu0 0
        %1364 = vmatpush.bf16.msra.mxu0 0
        %1365 = vmatpush.bf16.msra.mxu0 0
        %1366 = vmatpush.bf16.msra.mxu0 0
        %1367 = vmatpush.bf16.msra.mxu0 0
        %1368 = vmatpush.bf16.msra.mxu0 0
        %1369 = vmatpush.bf16.msra.mxu0 %v801
        %1370 = vmatmul.bf16.gmra.mxu0 %v1334
        %v1371 = vpop.f32.mrf.mxu0
        %v1372 = vadd.f32 %v661, %v1371
        %v1373 = vpop.f32.mrf.mxu0
        %1374 = vdwg.mxu0
        %v1375 = vpack.c.bf16 %v1329, %v1329
        %1376 = vmatpush.bf16.msra.mxu0 %v911
        %1377 = vmatpush.bf16.msra.mxu0 %v909
        %1378 = vmatpush.bf16.msra.mxu0 %v907
        %1379 = vmatpush.bf16.msra.mxu0 %v905
        %1380 = vmatpush.bf16.msra.mxu0 %v903
        %1381 = vmatpush.bf16.msra.mxu0 %v901
        %1382 = vmatpush.bf16.msra.mxu0 %v899
        %1383 = vmatpush.bf16.msra.mxu0 %v897
        %1384 = vmatmul.bf16.gmra.mxu0 %v1375
        %v1385 = vpop.f32.mrf.mxu0
        %v1386 = vadd.f32 0.0, %v1385
        %v1387 = vpop.f32.mrf.mxu0
        %1388 = vdwg.mxu0
        %1389 = vmatpush.bf16.msra.mxu0 %v912
        %1390 = vmatpush.bf16.msra.mxu0 %v910
        %1391 = vmatpush.bf16.msra.mxu0 %v908
        %1392 = vmatpush.bf16.msra.mxu0 %v906
        %1393 = vmatpush.bf16.msra.mxu0 %v904
        %1394 = vmatpush.bf16.msra.mxu0 %v902
        %1395 = vmatpush.bf16.msra.mxu0 %v900
        %1396 = vmatpush.bf16.msra.mxu0 %v898
        %1397 = vmatmul.bf16.gmra.mxu0 %v1375
        %v1398 = vpop.f32.mrf.mxu0
        %v1399 = vadd.f32 0.0, %v1398
        %v1400 = vpop.f32.mrf.mxu0
        %1401 = vdwg.mxu0
        %v1402 = vadd.f32 %v1346, %v1386
        %v1403 = vxor.u32 %v1402, 2147483648
        %v1404 = vmul.f32 %v1403, 1.442695
        %v1405 = vpow.pop %v1404
        %v1406 = vadd.f32 %v1405, 1.0
        %v1407 = vrcp.pop %v1406
        %v1408 = vmul.f32 %v1406, %v1407
        %v1409 = vsub.f32 1.0, %v1408
        %v1410 = vmul.f32 %v1407, %v1409
        %v1411 = vadd.f32 %v1407, %v1410
        %vm1412 = vweird.f32 %v1406
        %vm1413 = vweird.f32 %v1407
        %vm1414 = vmor %vm1412, %vm1413
        %v1415 = vsel %vm1414, %v1407, %v1411
        %v1416 = vand.u32 2147483647, %v1406
        %vm1417 = vcmp.eq.f32.partialorder %v1416, 8.507059e+37
        %v1418 = vand.u32 %v1406, 2147483648
        %v1419 = vor.u32 1.1754944e-38, %v1418
        %v1420 = vsel %vm1417, %v1419, %v1415
        %v1421 = vmul.f32 1.0, %v1420
        %v1422 = vadd.f32 %v1359, %v1399
        %v1423 = vxor.u32 %v1422, 2147483648
        %v1424 = vmul.f32 %v1423, 1.442695
        %v1425 = vpow.pop %v1424
        %v1426 = vadd.f32 %v1425, 1.0
        %v1427 = vrcp.pop %v1426
        %v1428 = vmul.f32 %v1426, %v1427
        %v1429 = vsub.f32 1.0, %v1428
        %v1430 = vmul.f32 %v1427, %v1429
        %v1431 = vadd.f32 %v1427, %v1430
        %vm1432 = vweird.f32 %v1426
        %vm1433 = vweird.f32 %v1427
        %vm1434 = vmor %vm1432, %vm1433
        %v1435 = vsel %vm1434, %v1427, %v1431
        %v1436 = vand.u32 2147483647, %v1426
        %vm1437 = vcmp.eq.f32.partialorder %v1436, 8.507059e+37
        %v1438 = vand.u32 %v1426, 2147483648
        %v1439 = vor.u32 1.1754944e-38, %v1438
        %v1440 = vsel %vm1437, %v1439, %v1435
        %v1441 = vmul.f32 1.0, %v1440
        %v1442 = vmul.f32 %v1441, %v1329
        %v1443 = vpack.c.bf16 %v1442, %v1442
        %1444 = vmatpush.bf16.msra.mxu0 %v1036
        %1445 = vmatpush.bf16.msra.mxu0 %v1035
        %1446 = vmatpush.bf16.msra.mxu0 %v1034
        %1447 = vmatpush.bf16.msra.mxu0 %v1033
        %1448 = vmatpush.bf16.msra.mxu0 %v1032
        %1449 = vmatpush.bf16.msra.mxu0 %v1031
        %1450 = vmatpush.bf16.msra.mxu0 %v1030
        %1451 = vmatpush.bf16.msra.mxu0 %v1029
        %1452 = vmatmul.bf16.gmra.mxu0 %v1443
        %v1453 = vpop.f32.mrf.mxu0
        %v1454 = vadd.f32 0.0, %v1453
        %v1455 = vpop.f32.mrf.mxu0
        %1456 = vdwg.mxu0
        %v1457 = vadd.f32 %v1372, %v1454
        %v1458 = vtanh.pop %v1457
        %v1459 = vmul.f32 %v1458, %v415
        %v1460 = vsub.f32 %v1459, %v1329
        %v1461 = vmul.f32 %v1421, %v1460
        %v1462 = vadd.f32 %v1329, %v1461
        %s1463 = scalar_lea.vmem %s363, 32 [#allocation2]
        %v1464 = vld [vmem:[%s1463] sm:$0xff]
        %v1465 = vpack.c.bf16 %v1464, %v1464
        %v1467 = vsel %vm805, %v1465, 0
        %1469 = vmatpush.bf16.msra.mxu0 0
        %1470 = vmatpush.bf16.msra.mxu0 0
        %1471 = vmatpush.bf16.msra.mxu0 0
        %1472 = vmatpush.bf16.msra.mxu0 0
        %1473 = vmatpush.bf16.msra.mxu0 0
        %1474 = vmatpush.bf16.msra.mxu0 0
        %1475 = vmatpush.bf16.msra.mxu0 0
        %1476 = vmatpush.bf16.msra.mxu0 %v799
        %1477 = vmatmul.bf16.gmra.mxu0 %v1467
        %v1478 = vpop.f32.mrf.mxu0
        %v1479 = vadd.f32 %v635, %v1478
        %v1480 = vpop.f32.mrf.mxu0
        %1481 = vdwg.mxu0
        %1482 = vmatpush.bf16.msra.mxu0 0
        %1483 = vmatpush.bf16.msra.mxu0 0
        %1484 = vmatpush.bf16.msra.mxu0 0
        %1485 = vmatpush.bf16.msra.mxu0 0
        %1486 = vmatpush.bf16.msra.mxu0 0
        %1487 = vmatpush.bf16.msra.mxu0 0
        %1488 = vmatpush.bf16.msra.mxu0 0
        %1489 = vmatpush.bf16.msra.mxu0 %v800
        %1490 = vmatmul.bf16.gmra.mxu0 %v1467
        %v1491 = vpop.f32.mrf.mxu0
        %v1492 = vadd.f32 %v648, %v1491
        %v1493 = vpop.f32.mrf.mxu0
        %1494 = vdwg.mxu0
        %1495 = vmatpush.bf16.msra.mxu0 0
        %1496 = vmatpush.bf16.msra.mxu0 0
        %1497 = vmatpush.bf16.msra.mxu0 0
        %1498 = vmatpush.bf16.msra.mxu0 0
        %1499 = vmatpush.bf16.msra.mxu0 0
        %1500 = vmatpush.bf16.msra.mxu0 0
        %1501 = vmatpush.bf16.msra.mxu0 0
        %1502 = vmatpush.bf16.msra.mxu0 %v801
        %1503 = vmatmul.bf16.gmra.mxu0 %v1467
        %v1504 = vpop.f32.mrf.mxu0
        %v1505 = vadd.f32 %v661, %v1504
        %v1506 = vpop.f32.mrf.mxu0
        %1507 = vdwg.mxu0
        %v1508 = vpack.c.bf16 %v1462, %v1462
        %1509 = vmatpush.bf16.msra.mxu0 %v911
        %1510 = vmatpush.bf16.msra.mxu0 %v909
        %1511 = vmatpush.bf16.msra.mxu0 %v907
        %1512 = vmatpush.bf16.msra.mxu0 %v905
        %1513 = vmatpush.bf16.msra.mxu0 %v903
        %1514 = vmatpush.bf16.msra.mxu0 %v901
        %1515 = vmatpush.bf16.msra.mxu0 %v899
        %1516 = vmatpush.bf16.msra.mxu0 %v897
        %1517 = vmatmul.bf16.gmra.mxu0 %v1508
        %v1518 = vpop.f32.mrf.mxu0
        %v1519 = vadd.f32 0.0, %v1518
        %v1520 = vpop.f32.mrf.mxu0
        %1521 = vdwg.mxu0
        %1522 = vmatpush.bf16.msra.mxu0 %v912
        %1523 = vmatpush.bf16.msra.mxu0 %v910
        %1524 = vmatpush.bf16.msra.mxu0 %v908
        %1525 = vmatpush.bf16.msra.mxu0 %v906
        %1526 = vmatpush.bf16.msra.mxu0 %v904
        %1527 = vmatpush.bf16.msra.mxu0 %v902
        %1528 = vmatpush.bf16.msra.mxu0 %v900
        %1529 = vmatpush.bf16.msra.mxu0 %v898
        %1530 = vmatmul.bf16.gmra.mxu0 %v1508
        %v1531 = vpop.f32.mrf.mxu0
        %v1532 = vadd.f32 0.0, %v1531
        %v1533 = vpop.f32.mrf.mxu0
        %1534 = vdwg.mxu0
        %v1535 = vadd.f32 %v1479, %v1519
        %v1536 = vxor.u32 %v1535, 2147483648
        %v1537 = vmul.f32 %v1536, 1.442695
        %v1538 = vpow.pop %v1537
        %v1539 = vadd.f32 %v1538, 1.0
        %v1540 = vrcp.pop %v1539
        %v1541 = vmul.f32 %v1539, %v1540
        %v1542 = vsub.f32 1.0, %v1541
        %v1543 = vmul.f32 %v1540, %v1542
        %v1544 = vadd.f32 %v1540, %v1543
        %vm1545 = vweird.f32 %v1539
        %vm1546 = vweird.f32 %v1540
        %vm1547 = vmor %vm1545, %vm1546
        %v1548 = vsel %vm1547, %v1540, %v1544
        %v1549 = vand.u32 2147483647, %v1539
        %vm1550 = vcmp.eq.f32.partialorder %v1549, 8.507059e+37
        %v1551 = vand.u32 %v1539, 2147483648
        %v1552 = vor.u32 1.1754944e-38, %v1551
        %v1553 = vsel %vm1550, %v1552, %v1548
        %v1554 = vmul.f32 1.0, %v1553
        %v1555 = vadd.f32 %v1492, %v1532
        %v1556 = vxor.u32 %v1555, 2147483648
        %v1557 = vmul.f32 %v1556, 1.442695
        %v1558 = vpow.pop %v1557
        %v1559 = vadd.f32 %v1558, 1.0
        %v1560 = vrcp.pop %v1559
        %v1561 = vmul.f32 %v1559, %v1560
        %v1562 = vsub.f32 1.0, %v1561
        %v1563 = vmul.f32 %v1560, %v1562
        %v1564 = vadd.f32 %v1560, %v1563
        %vm1565 = vweird.f32 %v1559
        %vm1566 = vweird.f32 %v1560
        %vm1567 = vmor %vm1565, %vm1566
        %v1568 = vsel %vm1567, %v1560, %v1564
        %v1569 = vand.u32 2147483647, %v1559
        %vm1570 = vcmp.eq.f32.partialorder %v1569, 8.507059e+37
        %v1571 = vand.u32 %v1559, 2147483648
        %v1572 = vor.u32 1.1754944e-38, %v1571
        %v1573 = vsel %vm1570, %v1572, %v1568
        %v1574 = vmul.f32 1.0, %v1573
        %v1575 = vmul.f32 %v1574, %v1462
        %v1576 = vpack.c.bf16 %v1575, %v1575
        %1577 = vmatpush.bf16.msra.mxu0 %v1036
        %1578 = vmatpush.bf16.msra.mxu0 %v1035
        %1579 = vmatpush.bf16.msra.mxu0 %v1034
        %1580 = vmatpush.bf16.msra.mxu0 %v1033
        %1581 = vmatpush.bf16.msra.mxu0 %v1032
        %1582 = vmatpush.bf16.msra.mxu0 %v1031
        %1583 = vmatpush.bf16.msra.mxu0 %v1030
        %1584 = vmatpush.bf16.msra.mxu0 %v1029
        %1585 = vmatmul.bf16.gmra.mxu0 %v1576
        %v1586 = vpop.f32.mrf.mxu0
        %v1587 = vadd.f32 0.0, %v1586
        %v1588 = vpop.f32.mrf.mxu0
        %1589 = vdwg.mxu0
        %v1590 = vadd.f32 %v1505, %v1587
        %v1591 = vtanh.pop %v1590
        %v1592 = vmul.f32 %v1591, %v415
        %v1593 = vsub.f32 %v1592, %v1462
        %v1594 = vmul.f32 %v1554, %v1593
        %v1595 = vadd.f32 %v1462, %v1594
        %s1596 = scalar_lea.vmem %s363, 40 [#allocation2]
        %v1597 = vld [vmem:[%s1596] sm:$0xff]
        %v1598 = vpack.c.bf16 %v1597, %v1597
        %v1600 = vsel %vm805, %v1598, 0
        %1602 = vmatpush.bf16.msra.mxu0 0
        %1603 = vmatpush.bf16.msra.mxu0 0
        %1604 = vmatpush.bf16.msra.mxu0 0
        %1605 = vmatpush.bf16.msra.mxu0 0
        %1606 = vmatpush.bf16.msra.mxu0 0
        %1607 = vmatpush.bf16.msra.mxu0 0
        %1608 = vmatpush.bf16.msra.mxu0 0
        %1609 = vmatpush.bf16.msra.mxu0 %v799
        %1610 = vmatmul.bf16.gmra.mxu0 %v1600
        %v1611 = vpop.f32.mrf.mxu0
        %v1612 = vadd.f32 %v635, %v1611
        %v1613 = vpop.f32.mrf.mxu0
        %1614 = vdwg.mxu0
        %1615 = vmatpush.bf16.msra.mxu0 0
        %1616 = vmatpush.bf16.msra.mxu0 0
        %1617 = vmatpush.bf16.msra.mxu0 0
        %1618 = vmatpush.bf16.msra.mxu0 0
        %1619 = vmatpush.bf16.msra.mxu0 0
        %1620 = vmatpush.bf16.msra.mxu0 0
        %1621 = vmatpush.bf16.msra.mxu0 0
        %1622 = vmatpush.bf16.msra.mxu0 %v800
        %1623 = vmatmul.bf16.gmra.mxu0 %v1600
        %v1624 = vpop.f32.mrf.mxu0
        %v1625 = vadd.f32 %v648, %v1624
        %v1626 = vpop.f32.mrf.mxu0
        %1627 = vdwg.mxu0
        %1628 = vmatpush.bf16.msra.mxu0 0
        %1629 = vmatpush.bf16.msra.mxu0 0
        %1630 = vmatpush.bf16.msra.mxu0 0
        %1631 = vmatpush.bf16.msra.mxu0 0
        %1632 = vmatpush.bf16.msra.mxu0 0
        %1633 = vmatpush.bf16.msra.mxu0 0
        %1634 = vmatpush.bf16.msra.mxu0 0
        %1635 = vmatpush.bf16.msra.mxu0 %v801
        %1636 = vmatmul.bf16.gmra.mxu0 %v1600
        %v1637 = vpop.f32.mrf.mxu0
        %v1638 = vadd.f32 %v661, %v1637
        %v1639 = vpop.f32.mrf.mxu0
        %1640 = vdwg.mxu0
        %v1641 = vpack.c.bf16 %v1595, %v1595
        %1642 = vmatpush.bf16.msra.mxu0 %v911
        %1643 = vmatpush.bf16.msra.mxu0 %v909
        %1644 = vmatpush.bf16.msra.mxu0 %v907
        %1645 = vmatpush.bf16.msra.mxu0 %v905
        %1646 = vmatpush.bf16.msra.mxu0 %v903
        %1647 = vmatpush.bf16.msra.mxu0 %v901
        %1648 = vmatpush.bf16.msra.mxu0 %v899
        %1649 = vmatpush.bf16.msra.mxu0 %v897
        %1650 = vmatmul.bf16.gmra.mxu0 %v1641
        %v1651 = vpop.f32.mrf.mxu0
        %v1652 = vadd.f32 0.0, %v1651
        %v1653 = vpop.f32.mrf.mxu0
        %1654 = vdwg.mxu0
        %1655 = vmatpush.bf16.msra.mxu0 %v912
        %1656 = vmatpush.bf16.msra.mxu0 %v910
        %1657 = vmatpush.bf16.msra.mxu0 %v908
        %1658 = vmatpush.bf16.msra.mxu0 %v906
        %1659 = vmatpush.bf16.msra.mxu0 %v904
        %1660 = vmatpush.bf16.msra.mxu0 %v902
        %1661 = vmatpush.bf16.msra.mxu0 %v900
        %1662 = vmatpush.bf16.msra.mxu0 %v898
        %1663 = vmatmul.bf16.gmra.mxu0 %v1641
        %v1664 = vpop.f32.mrf.mxu0
        %v1665 = vadd.f32 0.0, %v1664
        %v1666 = vpop.f32.mrf.mxu0
        %1667 = vdwg.mxu0
        %v1668 = vadd.f32 %v1612, %v1652
        %v1669 = vxor.u32 %v1668, 2147483648
        %v1670 = vmul.f32 %v1669, 1.442695
        %v1671 = vpow.pop %v1670
        %v1672 = vadd.f32 %v1671, 1.0
        %v1673 = vrcp.pop %v1672
        %v1674 = vmul.f32 %v1672, %v1673
        %v1675 = vsub.f32 1.0, %v1674
        %v1676 = vmul.f32 %v1673, %v1675
        %v1677 = vadd.f32 %v1673, %v1676
        %vm1678 = vweird.f32 %v1672
        %vm1679 = vweird.f32 %v1673
        %vm1680 = vmor %vm1678, %vm1679
        %v1681 = vsel %vm1680, %v1673, %v1677
        %v1682 = vand.u32 2147483647, %v1672
        %vm1683 = vcmp.eq.f32.partialorder %v1682, 8.507059e+37
        %v1684 = vand.u32 %v1672, 2147483648
        %v1685 = vor.u32 1.1754944e-38, %v1684
        %v1686 = vsel %vm1683, %v1685, %v1681
        %v1687 = vmul.f32 1.0, %v1686
        %v1688 = vadd.f32 %v1625, %v1665
        %v1689 = vxor.u32 %v1688, 2147483648
        %v1690 = vmul.f32 %v1689, 1.442695
        %v1691 = vpow.pop %v1690
        %v1692 = vadd.f32 %v1691, 1.0
        %v1693 = vrcp.pop %v1692
        %v1694 = vmul.f32 %v1692, %v1693
        %v1695 = vsub.f32 1.0, %v1694
        %v1696 = vmul.f32 %v1693, %v1695
        %v1697 = vadd.f32 %v1693, %v1696
        %vm1698 = vweird.f32 %v1692
        %vm1699 = vweird.f32 %v1693
        %vm1700 = vmor %vm1698, %vm1699
        %v1701 = vsel %vm1700, %v1693, %v1697
        %v1702 = vand.u32 2147483647, %v1692
        %vm1703 = vcmp.eq.f32.partialorder %v1702, 8.507059e+37
        %v1704 = vand.u32 %v1692, 2147483648
        %v1705 = vor.u32 1.1754944e-38, %v1704
        %v1706 = vsel %vm1703, %v1705, %v1701
        %v1707 = vmul.f32 1.0, %v1706
        %v1708 = vmul.f32 %v1707, %v1595
        %v1709 = vpack.c.bf16 %v1708, %v1708
        %1710 = vmatpush.bf16.msra.mxu0 %v1036
        %1711 = vmatpush.bf16.msra.mxu0 %v1035
        %1712 = vmatpush.bf16.msra.mxu0 %v1034
        %1713 = vmatpush.bf16.msra.mxu0 %v1033
        %1714 = vmatpush.bf16.msra.mxu0 %v1032
        %1715 = vmatpush.bf16.msra.mxu0 %v1031
        %1716 = vmatpush.bf16.msra.mxu0 %v1030
        %1717 = vmatpush.bf16.msra.mxu0 %v1029
        %1718 = vmatmul.bf16.gmra.mxu0 %v1709
        %v1719 = vpop.f32.mrf.mxu0
        %v1720 = vadd.f32 0.0, %v1719
        %v1721 = vpop.f32.mrf.mxu0
        %1722 = vdwg.mxu0
        %v1723 = vadd.f32 %v1638, %v1720
        %v1724 = vtanh.pop %v1723
        %v1725 = vmul.f32 %v1724, %v415
        %v1726 = vsub.f32 %v1725, %v1595
        %v1727 = vmul.f32 %v1687, %v1726
        %v1728 = vadd.f32 %v1595, %v1727
        %s1729 = scalar_lea.vmem %s363, 48 [#allocation2]
        %v1730 = vld [vmem:[%s1729] sm:$0xff]
        %v1731 = vpack.c.bf16 %v1730, %v1730
        %v1733 = vsel %vm805, %v1731, 0
        %1735 = vmatpush.bf16.msra.mxu0 0
        %1736 = vmatpush.bf16.msra.mxu0 0
        %1737 = vmatpush.bf16.msra.mxu0 0
        %1738 = vmatpush.bf16.msra.mxu0 0
        %1739 = vmatpush.bf16.msra.mxu0 0
        %1740 = vmatpush.bf16.msra.mxu0 0
        %1741 = vmatpush.bf16.msra.mxu0 0
        %1742 = vmatpush.bf16.msra.mxu0 %v799
        %1743 = vmatmul.bf16.gmra.mxu0 %v1733
        %v1744 = vpop.f32.mrf.mxu0
        %v1745 = vadd.f32 %v635, %v1744
        %v1746 = vpop.f32.mrf.mxu0
        %1747 = vdwg.mxu0
        %1748 = vmatpush.bf16.msra.mxu0 0
        %1749 = vmatpush.bf16.msra.mxu0 0
        %1750 = vmatpush.bf16.msra.mxu0 0
        %1751 = vmatpush.bf16.msra.mxu0 0
        %1752 = vmatpush.bf16.msra.mxu0 0
        %1753 = vmatpush.bf16.msra.mxu0 0
        %1754 = vmatpush.bf16.msra.mxu0 0
        %1755 = vmatpush.bf16.msra.mxu0 %v800
        %1756 = vmatmul.bf16.gmra.mxu0 %v1733
        %v1757 = vpop.f32.mrf.mxu0
        %v1758 = vadd.f32 %v648, %v1757
        %v1759 = vpop.f32.mrf.mxu0
        %1760 = vdwg.mxu0
        %1761 = vmatpush.bf16.msra.mxu0 0
        %1762 = vmatpush.bf16.msra.mxu0 0
        %1763 = vmatpush.bf16.msra.mxu0 0
        %1764 = vmatpush.bf16.msra.mxu0 0
        %1765 = vmatpush.bf16.msra.mxu0 0
        %1766 = vmatpush.bf16.msra.mxu0 0
        %1767 = vmatpush.bf16.msra.mxu0 0
        %1768 = vmatpush.bf16.msra.mxu0 %v801
        %1769 = vmatmul.bf16.gmra.mxu0 %v1733
        %v1770 = vpop.f32.mrf.mxu0
        %v1771 = vadd.f32 %v661, %v1770
        %v1772 = vpop.f32.mrf.mxu0
        %1773 = vdwg.mxu0
        %v1774 = vpack.c.bf16 %v1728, %v1728
        %1775 = vmatpush.bf16.msra.mxu0 %v911
        %1776 = vmatpush.bf16.msra.mxu0 %v909
        %1777 = vmatpush.bf16.msra.mxu0 %v907
        %1778 = vmatpush.bf16.msra.mxu0 %v905
        %1779 = vmatpush.bf16.msra.mxu0 %v903
        %1780 = vmatpush.bf16.msra.mxu0 %v901
        %1781 = vmatpush.bf16.msra.mxu0 %v899
        %1782 = vmatpush.bf16.msra.mxu0 %v897
        %1783 = vmatmul.bf16.gmra.mxu0 %v1774
        %v1784 = vpop.f32.mrf.mxu0
        %v1785 = vadd.f32 0.0, %v1784
        %v1786 = vpop.f32.mrf.mxu0
        %1787 = vdwg.mxu0
        %1788 = vmatpush.bf16.msra.mxu0 %v912
        %1789 = vmatpush.bf16.msra.mxu0 %v910
        %1790 = vmatpush.bf16.msra.mxu0 %v908
        %1791 = vmatpush.bf16.msra.mxu0 %v906
        %1792 = vmatpush.bf16.msra.mxu0 %v904
        %1793 = vmatpush.bf16.msra.mxu0 %v902
        %1794 = vmatpush.bf16.msra.mxu0 %v900
        %1795 = vmatpush.bf16.msra.mxu0 %v898
        %1796 = vmatmul.bf16.gmra.mxu0 %v1774
        %v1797 = vpop.f32.mrf.mxu0
        %v1798 = vadd.f32 0.0, %v1797
        %v1799 = vpop.f32.mrf.mxu0
        %1800 = vdwg.mxu0
        %v1801 = vadd.f32 %v1745, %v1785
        %v1802 = vxor.u32 %v1801, 2147483648
        %v1803 = vmul.f32 %v1802, 1.442695
        %v1804 = vpow.pop %v1803
        %v1805 = vadd.f32 %v1804, 1.0
        %v1806 = vrcp.pop %v1805
        %v1807 = vmul.f32 %v1805, %v1806
        %v1808 = vsub.f32 1.0, %v1807
        %v1809 = vmul.f32 %v1806, %v1808
        %v1810 = vadd.f32 %v1806, %v1809
        %vm1811 = vweird.f32 %v1805
        %vm1812 = vweird.f32 %v1806
        %vm1813 = vmor %vm1811, %vm1812
        %v1814 = vsel %vm1813, %v1806, %v1810
        %v1815 = vand.u32 2147483647, %v1805
        %vm1816 = vcmp.eq.f32.partialorder %v1815, 8.507059e+37
        %v1817 = vand.u32 %v1805, 2147483648
        %v1818 = vor.u32 1.1754944e-38, %v1817
        %v1819 = vsel %vm1816, %v1818, %v1814
        %v1820 = vmul.f32 1.0, %v1819
        %v1821 = vadd.f32 %v1758, %v1798
        %v1822 = vxor.u32 %v1821, 2147483648
        %v1823 = vmul.f32 %v1822, 1.442695
        %v1824 = vpow.pop %v1823
        %v1825 = vadd.f32 %v1824, 1.0
        %v1826 = vrcp.pop %v1825
        %v1827 = vmul.f32 %v1825, %v1826
        %v1828 = vsub.f32 1.0, %v1827
        %v1829 = vmul.f32 %v1826, %v1828
        %v1830 = vadd.f32 %v1826, %v1829
        %vm1831 = vweird.f32 %v1825
        %vm1832 = vweird.f32 %v1826
        %vm1833 = vmor %vm1831, %vm1832
        %v1834 = vsel %vm1833, %v1826, %v1830
        %v1835 = vand.u32 2147483647, %v1825
        %vm1836 = vcmp.eq.f32.partialorder %v1835, 8.507059e+37
        %v1837 = vand.u32 %v1825, 2147483648
        %v1838 = vor.u32 1.1754944e-38, %v1837
        %v1839 = vsel %vm1836, %v1838, %v1834
        %v1840 = vmul.f32 1.0, %v1839
        %v1841 = vmul.f32 %v1840, %v1728
        %v1842 = vpack.c.bf16 %v1841, %v1841
        %1843 = vmatpush.bf16.msra.mxu0 %v1036
        %1844 = vmatpush.bf16.msra.mxu0 %v1035
        %1845 = vmatpush.bf16.msra.mxu0 %v1034
        %1846 = vmatpush.bf16.msra.mxu0 %v1033
        %1847 = vmatpush.bf16.msra.mxu0 %v1032
        %1848 = vmatpush.bf16.msra.mxu0 %v1031
        %1849 = vmatpush.bf16.msra.mxu0 %v1030
        %1850 = vmatpush.bf16.msra.mxu0 %v1029
        %1851 = vmatmul.bf16.gmra.mxu0 %v1842
        %v1852 = vpop.f32.mrf.mxu0
        %v1853 = vadd.f32 0.0, %v1852
        %v1854 = vpop.f32.mrf.mxu0
        %1855 = vdwg.mxu0
        %v1856 = vadd.f32 %v1771, %v1853
        %v1857 = vtanh.pop %v1856
        %v1858 = vmul.f32 %v1857, %v415
        %v1859 = vsub.f32 %v1858, %v1728
        %v1860 = vmul.f32 %v1820, %v1859
        %v1861 = vadd.f32 %v1728, %v1860
        %s1862 = scalar_lea.vmem %s363, 56 [#allocation2]
        %v1863 = vld [vmem:[%s1862] sm:$0xff]
        %v1864 = vpack.c.bf16 %v1863, %v1863
        %v1866 = vsel %vm805, %v1864, 0
        %1868 = vmatpush.bf16.msra.mxu0 0
        %1869 = vmatpush.bf16.msra.mxu0 0
        %1870 = vmatpush.bf16.msra.mxu0 0
        %1871 = vmatpush.bf16.msra.mxu0 0
        %1872 = vmatpush.bf16.msra.mxu0 0
        %1873 = vmatpush.bf16.msra.mxu0 0
        %1874 = vmatpush.bf16.msra.mxu0 0
        %1875 = vmatpush.bf16.msra.mxu0 %v799
        %1876 = vmatmul.bf16.gmra.mxu0 %v1866
        %v1877 = vpop.f32.mrf.mxu0
        %v1878 = vadd.f32 %v635, %v1877
        %v1879 = vpop.f32.mrf.mxu0
        %1880 = vdwg.mxu0
        %1881 = vmatpush.bf16.msra.mxu0 0
        %1882 = vmatpush.bf16.msra.mxu0 0
        %1883 = vmatpush.bf16.msra.mxu0 0
        %1884 = vmatpush.bf16.msra.mxu0 0
        %1885 = vmatpush.bf16.msra.mxu0 0
        %1886 = vmatpush.bf16.msra.mxu0 0
        %1887 = vmatpush.bf16.msra.mxu0 0
        %1888 = vmatpush.bf16.msra.mxu0 %v800
        %1889 = vmatmul.bf16.gmra.mxu0 %v1866
        %v1890 = vpop.f32.mrf.mxu0
        %v1891 = vadd.f32 %v648, %v1890
        %v1892 = vpop.f32.mrf.mxu0
        %1893 = vdwg.mxu0
        %1894 = vmatpush.bf16.msra.mxu0 0
        %1895 = vmatpush.bf16.msra.mxu0 0
        %1896 = vmatpush.bf16.msra.mxu0 0
        %1897 = vmatpush.bf16.msra.mxu0 0
        %1898 = vmatpush.bf16.msra.mxu0 0
        %1899 = vmatpush.bf16.msra.mxu0 0
        %1900 = vmatpush.bf16.msra.mxu0 0
        %1901 = vmatpush.bf16.msra.mxu0 %v801
        %1902 = vmatmul.bf16.gmra.mxu0 %v1866
        %v1903 = vpop.f32.mrf.mxu0
        %v1904 = vadd.f32 %v661, %v1903
        %v1905 = vpop.f32.mrf.mxu0
        %1906 = vdwg.mxu0
        %v1907 = vpack.c.bf16 %v1861, %v1861
        %1908 = vmatpush.bf16.msra.mxu0 %v911
        %1909 = vmatpush.bf16.msra.mxu0 %v909
        %1910 = vmatpush.bf16.msra.mxu0 %v907
        %1911 = vmatpush.bf16.msra.mxu0 %v905
        %1912 = vmatpush.bf16.msra.mxu0 %v903
        %1913 = vmatpush.bf16.msra.mxu0 %v901
        %1914 = vmatpush.bf16.msra.mxu0 %v899
        %1915 = vmatpush.bf16.msra.mxu0 %v897
        %1916 = vmatmul.bf16.gmra.mxu0 %v1907
        %v1917 = vpop.f32.mrf.mxu0
        %v1918 = vadd.f32 0.0, %v1917
        %v1919 = vpop.f32.mrf.mxu0
        %1920 = vdwg.mxu0
        %1921 = vmatpush.bf16.msra.mxu0 %v912
        %1922 = vmatpush.bf16.msra.mxu0 %v910
        %1923 = vmatpush.bf16.msra.mxu0 %v908
        %1924 = vmatpush.bf16.msra.mxu0 %v906
        %1925 = vmatpush.bf16.msra.mxu0 %v904
        %1926 = vmatpush.bf16.msra.mxu0 %v902
        %1927 = vmatpush.bf16.msra.mxu0 %v900
        %1928 = vmatpush.bf16.msra.mxu0 %v898
        %1929 = vmatmul.bf16.gmra.mxu0 %v1907
        %v1930 = vpop.f32.mrf.mxu0
        %v1931 = vadd.f32 0.0, %v1930
        %v1932 = vpop.f32.mrf.mxu0
        %1933 = vdwg.mxu0
        %v1934 = vadd.f32 %v1878, %v1918
        %v1935 = vxor.u32 %v1934, 2147483648
        %v1936 = vmul.f32 %v1935, 1.442695
        %v1937 = vpow.pop %v1936
        %v1938 = vadd.f32 %v1937, 1.0
        %v1939 = vrcp.pop %v1938
        %v1940 = vmul.f32 %v1938, %v1939
        %v1941 = vsub.f32 1.0, %v1940
        %v1942 = vmul.f32 %v1939, %v1941
        %v1943 = vadd.f32 %v1939, %v1942
        %vm1944 = vweird.f32 %v1938
        %vm1945 = vweird.f32 %v1939
        %vm1946 = vmor %vm1944, %vm1945
        %v1947 = vsel %vm1946, %v1939, %v1943
        %v1948 = vand.u32 2147483647, %v1938
        %vm1949 = vcmp.eq.f32.partialorder %v1948, 8.507059e+37
        %v1950 = vand.u32 %v1938, 2147483648
        %v1951 = vor.u32 1.1754944e-38, %v1950
        %v1952 = vsel %vm1949, %v1951, %v1947
        %v1953 = vmul.f32 1.0, %v1952
        %v1954 = vadd.f32 %v1891, %v1931
        %v1955 = vxor.u32 %v1954, 2147483648
        %v1956 = vmul.f32 %v1955, 1.442695
        %v1957 = vpow.pop %v1956
        %v1958 = vadd.f32 %v1957, 1.0
        %v1959 = vrcp.pop %v1958
        %v1960 = vmul.f32 %v1958, %v1959
        %v1961 = vsub.f32 1.0, %v1960
        %v1962 = vmul.f32 %v1959, %v1961
        %v1963 = vadd.f32 %v1959, %v1962
        %vm1964 = vweird.f32 %v1958
        %vm1965 = vweird.f32 %v1959
        %vm1966 = vmor %vm1964, %vm1965
        %v1967 = vsel %vm1966, %v1959, %v1963
        %v1968 = vand.u32 2147483647, %v1958
        %vm1969 = vcmp.eq.f32.partialorder %v1968, 8.507059e+37
        %v1970 = vand.u32 %v1958, 2147483648
        %v1971 = vor.u32 1.1754944e-38, %v1970
        %v1972 = vsel %vm1969, %v1971, %v1967
        %v1973 = vmul.f32 1.0, %v1972
        %v1974 = vmul.f32 %v1973, %v1861
        %v1975 = vpack.c.bf16 %v1974, %v1974
        %1976 = vmatpush.bf16.msra.mxu0 %v1036
        %1977 = vmatpush.bf16.msra.mxu0 %v1035
        %1978 = vmatpush.bf16.msra.mxu0 %v1034
        %1979 = vmatpush.bf16.msra.mxu0 %v1033
        %1980 = vmatpush.bf16.msra.mxu0 %v1032
        %1981 = vmatpush.bf16.msra.mxu0 %v1031
        %1982 = vmatpush.bf16.msra.mxu0 %v1030
        %1983 = vmatpush.bf16.msra.mxu0 %v1029
        %1984 = vmatmul.bf16.gmra.mxu0 %v1975
        %v1985 = vpop.f32.mrf.mxu0
        %v1986 = vadd.f32 0.0, %v1985
        %v1987 = vpop.f32.mrf.mxu0
        %1988 = vdwg.mxu0
        %v1989 = vadd.f32 %v1904, %v1986
        %v1990 = vtanh.pop %v1989
        %v1991 = vmul.f32 %v1990, %v415
        %v1992 = vsub.f32 %v1991, %v1861
        %v1993 = vmul.f32 %v1953, %v1992
        %v1994 = vadd.f32 %v1861, %v1993
        %v1995 = vpack.c.bf16 %v1994, %v1994
        %v1996 = vld [vmem:[%s5] sm:$0xff]
        %v1997 = vld [vmem:[%s5 + $0x8] sm:$0xff]
        %v1998 = vld [vmem:[%s5 + $0x10] sm:$0xff]
        %v1999 = vld [vmem:[%s5 + $0x18] sm:$0xff]
        %v2000 = vld [vmem:[%s5 + $0x20] sm:$0xff]
        %v2001 = vld [vmem:[%s5 + $0x28] sm:$0xff]
        %v2002 = vld [vmem:[%s5 + $0x30] sm:$0xff]
        %v2003 = vld [vmem:[%s5 + $0x38] sm:$0xff]
        %v2004 = vld [vmem:[%s5 + $0x40] sm:$0xff]
        %v2005 = vld [vmem:[%s5 + $0x48] sm:$0xff]
        %v2006 = vld [vmem:[%s5 + $0x50] sm:$0xff]
        %v2007 = vld [vmem:[%s5 + $0x58] sm:$0xff]
        %v2008 = vld [vmem:[%s5 + $0x60] sm:$0xff]
        %v2009 = vld [vmem:[%s5 + $0x68] sm:$0xff]
        %v2010 = vld [vmem:[%s5 + $0x70] sm:$0xff]
        %v2011 = vld [vmem:[%s5 + $0x78] sm:$0xff]
        %v2028 = vunpack.c.l.b16 %v1996
        %v2029 = vunpack.c.h.b16 %v1996
        %v2030 = vunpack.c.l.b16 %v1997
        %v2031 = vunpack.c.h.b16 %v1997
        %v2032 = vunpack.c.l.b16 %v1998
        %v2033 = vunpack.c.h.b16 %v1998
        %v2034 = vunpack.c.l.b16 %v1999
        %v2035 = vunpack.c.h.b16 %v1999
        %v2036 = vunpack.c.l.b16 %v2000
        %v2037 = vunpack.c.h.b16 %v2000
        %v2038 = vunpack.c.l.b16 %v2001
        %v2039 = vunpack.c.h.b16 %v2001
        %v2040 = vunpack.c.l.b16 %v2002
        %v2041 = vunpack.c.h.b16 %v2002
        %v2042 = vunpack.c.l.b16 %v2003
        %v2043 = vunpack.c.h.b16 %v2003
        %v2044 = vunpack.c.l.b16 %v2004
        %v2045 = vunpack.c.h.b16 %v2004
        %v2046 = vunpack.c.l.b16 %v2005
        %v2047 = vunpack.c.h.b16 %v2005
        %v2048 = vunpack.c.l.b16 %v2006
        %v2049 = vunpack.c.h.b16 %v2006
        %v2050 = vunpack.c.l.b16 %v2007
        %v2051 = vunpack.c.h.b16 %v2007
        %v2052 = vunpack.c.l.b16 %v2008
        %v2053 = vunpack.c.h.b16 %v2008
        %v2054 = vunpack.c.l.b16 %v2009
        %v2055 = vunpack.c.h.b16 %v2009
        %v2056 = vunpack.c.l.b16 %v2010
        %v2057 = vunpack.c.h.b16 %v2010
        %v2058 = vunpack.c.l.b16 %v2011
        %v2059 = vunpack.c.h.b16 %v2011
        %v2060 = vpack.c.b16 %v2030, %v2028
        %v2061 = vpack.c.b16 %v2031, %v2029
        %v2062 = vpack.c.b16 %v2034, %v2032
        %v2063 = vpack.c.b16 %v2035, %v2033
        %v2064 = vpack.c.b16 %v2038, %v2036
        %v2065 = vpack.c.b16 %v2039, %v2037
        %v2066 = vpack.c.b16 %v2042, %v2040
        %v2067 = vpack.c.b16 %v2043, %v2041
        %v2068 = vpack.c.b16 %v2046, %v2044
        %v2069 = vpack.c.b16 %v2047, %v2045
        %v2070 = vpack.c.b16 %v2050, %v2048
        %v2071 = vpack.c.b16 %v2051, %v2049
        %v2072 = vpack.c.b16 %v2054, %v2052
        %v2073 = vpack.c.b16 %v2055, %v2053
        %v2074 = vpack.c.b16 %v2058, %v2056
        %v2075 = vpack.c.b16 %v2059, %v2057
        %2092 = vmatpush.bf16.msra.mxu0 %v2074
        %2093 = vmatpush.bf16.msra.mxu0 %v2072
        %2094 = vmatpush.bf16.msra.mxu0 %v2070
        %2095 = vmatpush.bf16.msra.mxu0 %v2068
        %2096 = vmatpush.bf16.msra.mxu0 %v2066
        %2097 = vmatpush.bf16.msra.mxu0 %v2064
        %2098 = vmatpush.bf16.msra.mxu0 %v2062
        %2099 = vmatpush.bf16.msra.mxu0 %v2060
        %2100 = vmatmul.bf16.gmra.mxu0 %v1995
        %v2101 = vpop.f32.mrf.mxu0
        %v2102 = vadd.f32 %v771, %v2101
        %v2103 = vpop.f32.mrf.mxu0
        %2104 = vdwg.mxu0
        %2105 = vmatpush.bf16.msra.mxu0 %v2075
        %2106 = vmatpush.bf16.msra.mxu0 %v2073
        %2107 = vmatpush.bf16.msra.mxu0 %v2071
        %2108 = vmatpush.bf16.msra.mxu0 %v2069
        %2109 = vmatpush.bf16.msra.mxu0 %v2067
        %2110 = vmatpush.bf16.msra.mxu0 %v2065
        %2111 = vmatpush.bf16.msra.mxu0 %v2063
        %2112 = vmatpush.bf16.msra.mxu0 %v2061
        %2113 = vmatmul.bf16.gmra.mxu0 %v1995
        %v2114 = vpop.f32.mrf.mxu0
        %v2115 = vadd.f32 %v784, %v2114
        %v2116 = vpop.f32.mrf.mxu0
        %2117 = vdwg.mxu0
        %v2119 = vperm.slane %v420, 0
        %v2120 = vperm.slane %v420, 1
        %v2123 = vadd.f32 %v2102, %v2119
        %v2124 = vadd.f32 %v2115, %v2120
        %v2125 = vxor.u32 %v2123, 2147483648
        %v2126 = vmul.f32 %v2125, 1.442695
        %v2127 = vpow.pop %v2126
        %v2128 = vadd.f32 %v2127, 1.0
        %v2129 = vrcp.pop %v2128
        %v2130 = vmul.f32 %v2128, %v2129
        %v2131 = vsub.f32 1.0, %v2130
        %v2132 = vmul.f32 %v2129, %v2131
        %v2133 = vadd.f32 %v2129, %v2132
        %vm2134 = vweird.f32 %v2128
        %vm2135 = vweird.f32 %v2129
        %vm2136 = vmor %vm2134, %vm2135
        %v2137 = vsel %vm2136, %v2129, %v2133
        %v2138 = vand.u32 2147483647, %v2128
        %vm2139 = vcmp.eq.f32.partialorder %v2138, 8.507059e+37
        %v2140 = vand.u32 %v2128, 2147483648
        %v2141 = vor.u32 1.1754944e-38, %v2140
        %v2142 = vsel %vm2139, %v2141, %v2137
        %v2143 = vmul.f32 1.0, %v2142
        %v2144 = vsub.f32 %v417, %v1990
        %v2145 = vmul.f32 %v2143, %v2144
        %v2146 = vadd.f32 %v1990, %v2145
        %v2147 = vtanh.pop %v2124
        %v2148 = vmul.f32 %v2147, %v2146
        %2149 = vst [vmem:[%s409] sm:$0xff] %v2148
        %s2150 = scalar_lea.vmem %s409, 8 [#allocation8]
        %2151 = vst [vmem:[%s2150] sm:$0xff] %v2146
        %s2152 = sand.u32 %s163, 1
        %s2153 = sand.u32 %s163, 1
        %s2154 = smul.addr %s2153, 16
        %s2155 = scalar_lea.vmem [#allocation8], %s2154
        // Predicated region
        $region129: #{gr_weight_forward.1} parent=111 // pred_check
          %p2156 = pneg %p173
        $region130: #{gr_weight_forward.1} parent=111 // pred_check_branch
          %2158 = sbr.rel (%p2156) target = $region132
        $region131: #{gr_weight_forward.1} parent=111 // pred_region
          %s2159 = smul.addr %s19, 8
          %s2160 = scalar_lea.vmem %s6, %s2159
          // Predicated region
          $region133: #{gr_weight_forward.1} parent=131 // pred_check
            _
          $region134: #{gr_weight_forward.1} parent=131 // pred_check_branch
            %2162 = sbr.rel (0) target = $region136
          $region135: #{gr_weight_forward.1} parent=131 // pred_region
            // Predicated region
            $region137: #{gr_weight_forward.1} parent=135 // pred_check
              _
            $region138: #{gr_weight_forward.1} parent=135 // pred_check_branch
              %2164 = sbr.rel (0) target = $region140
            $region139: #{gr_weight_forward.1} parent=135 // pred_region
              // Predicated region
              $region152: #{gr_weight_forward.1} parent=139 // pred_check
                _
              $region153: #{gr_weight_forward.1} parent=139 // pred_check_branch
                %2182 = sbr.rel (0) target = $region155
              $region154: #{gr_weight_forward.1} parent=139 // pred_region
                loop: start=0, step=1, limit=1
                $region156: #{gr_weight_forward.1} parent=154 // loop_pre_header
                  _
                $region157: #{gr_weight_forward.1} parent=154 // loop_header
                  %s2184 = sphi 0, %s2188
                  %p2185 = scmp.ge.s32.totalorder %s2184, 1
                  %s2189 = sphi %s2155, %s2155
                  %s2190 = sphi %s2160, %s2160
                $region158: #{gr_weight_forward.1} parent=154 // loop_header_branch
                  %2187 = sbr.rel (%p2185) target = $region162
                $region159: #{gr_weight_forward.1} parent=154 // loop_body
                  %v2191 = vld [vmem:[%s2189] sm:$0xff]
                  %2192 = vst [vmem:[%s2190] sm:$0xff] %v2191
                  %v2193 = vld [vmem:[%s2189 + $0x8] sm:$0xff]
                  %2194 = vst [vmem:[%s2190 + $0x10] sm:$0xff] %v2193
                $region160: #{gr_weight_forward.1} parent=154 // loop_footer
                  %s2188 = sadd.s32 1, %s2184
                $region161: #{gr_weight_forward.1} parent=154 // loop_footer_branch
                  %2183 = sbr.rel target = $region157
                $region162: #{gr_weight_forward.1} parent=154 // loop_exit
                  _
              $region155: #{gr_weight_forward.1} parent=139 // pred_fallthru
                _
              // Predicated region
              $region163: #{gr_weight_forward.1} parent=139 // pred_check
                _
              $region164: #{gr_weight_forward.1} parent=139 // pred_check_branch
                %2196 = sbr.rel target = $region166
              $region165: #{gr_weight_forward.1} parent=139 // pred_region
                _
              $region166: #{gr_weight_forward.1} parent=139 // pred_fallthru
                _
            $region140: #{gr_weight_forward.1} parent=135 // pred_fallthru
              _
            // Predicated region
            $region141: #{gr_weight_forward.1} parent=135 // pred_check
              _
            $region142: #{gr_weight_forward.1} parent=135 // pred_check_branch
              %2166 = sbr.rel target = $region144
            $region143: #{gr_weight_forward.1} parent=135 // pred_region
              %s2168 = ssub.s32 256, 1
              loop: start=0, step=1, limit=1
              $region145: #{gr_weight_forward.1} parent=143 // loop_pre_header
                _
              $region146: #{gr_weight_forward.1} parent=143 // loop_header
                %s2170 = sphi 0, %s2174
                %p2171 = scmp.ge.s32.totalorder %s2170, 1
                %s2175 = sphi %s2155, %s2155
                %s2176 = sphi %s2160, %s2160
              $region147: #{gr_weight_forward.1} parent=143 // loop_header_branch
                %2173 = sbr.rel (%p2171) target = $region151
              $region148: #{gr_weight_forward.1} parent=143 // loop_body
                %v2177 = vld [vmem:[%s2175] sm:%s2168]
                %2178 = vst [vmem:[%s2176] sm:%s2168] %v2177
                %v2179 = vld [vmem:[%s2175 + $0x8] sm:%s2168]
                %2180 = vst [vmem:[%s2176 + $0x10] sm:%s2168] %v2179
              $region149: #{gr_weight_forward.1} parent=143 // loop_footer
                %s2174 = sadd.s32 1, %s2170
              $region150: #{gr_weight_forward.1} parent=143 // loop_footer_branch
                %2169 = sbr.rel target = $region146
              $region151: #{gr_weight_forward.1} parent=143 // loop_exit
                _
            $region144: #{gr_weight_forward.1} parent=135 // pred_fallthru
              _
          $region136: #{gr_weight_forward.1} parent=131 // pred_fallthru
            _
          %2197 = vnop
        $region132: #{gr_weight_forward.1} parent=111 // pred_fallthru
          _
      $region112: #{gr_weight_forward.1} parent=5 // pred_fallthru
        _
      %p2198 = scmp.le.s32.totalorder 2, %s14
      // Predicated region
      $region167: #{gr_weight_forward.1} parent=5 // pred_check
        %p2199 = pneg %p2198
      $region168: #{gr_weight_forward.1} parent=5 // pred_check_branch
        %2201 = sbr.rel (%p2199) target = $region170
      $region169: #{gr_weight_forward.1} parent=5 // pred_region
        %s2202 = ssub.s32 %s14, 2
        // Predicated region
        $region171: #{gr_weight_forward.1} parent=169 // pred_check
          %p2203 = pneg %p179
        $region172: #{gr_weight_forward.1} parent=169 // pred_check_branch
          %2205 = sbr.rel (%p2203) target = $region174
        $region173: #{gr_weight_forward.1} parent=169 // pred_region
          %s2206 = sand.u32 %s164, 1
          %s2207 = sand.u32 %s164, 1
          %s2208 = smul.addr %s2207, 16
          %s2209 = scalar_lea.vmem [#allocation8], %s2208
        $region174: #{gr_weight_forward.1} parent=169 // pred_fallthru
          _
      $region170: #{gr_weight_forward.1} parent=5 // pred_fallthru
        _
    $region6: #{gr_weight_forward.1} parent=1 // loop_footer
      %s18 = sadd.s32 1, %s14
    $region7: #{gr_weight_forward.1} parent=1 // loop_footer_branch
      %13 = sbr.rel target = $region3
    $region8: #{gr_weight_forward.1} parent=1 // loop_exit
      _
    %2210 = vsyncpa [#allocation5], 1
    %s2211 = scalar_lea.sflag [#allocation5], 1
    %2212 = vsyncpa %s2211, 1
    %2213 = vsyncpa [#allocation7], 1

</llo_original>
